<compile_context>
chip_gen: v7x
topology: tpu7x:2x2x1
jax: 0.10.0
libtpu: 0.0.40
codegen_flags: <defaults>
</compile_context>

<pallas_src>
import jax
import jax.numpy as jnp
import numpy as np
from jax.experimental import pallas as pl
from jax.experimental.pallas import tpu as pltpu

_LANE = 128
_SUBLANE = 8


def _round_up(v, m):
    return (v + m - 1) // m * m


def _pad2(a, rows, cols):
    return jnp.zeros((rows, cols), a.dtype).at[:a.shape[0], :a.shape[1]].set(a)


# ----------------------------------------------------------------------------
# Kernel
# ----------------------------------------------------------------------------
def _gatv2_layer_body(x, w_ref, att_ref, b_ref, mask, apply_elu):
    """One GATv2Conv(heads=1, dropout=0) layer on in-VMEM values/refs."""
    fdim = att_ref.shape[1]                      # padded output width
    att = att_ref[...]                           # [1, fdim]

    # Packed source/target transform: one MXU matmul x @ [W_l | W_r].
    xlr = jnp.dot(x, w_ref[...], preferred_element_type=jnp.float32)  # [n, 2*fdim]
    xl = xlr[:, :fdim]                           # source-node features
    xr = xlr[:, fdim:]                           # target-node features

    # Vectorized GATv2 attention logits: broadcast add + leaky_relu on the VPU,
    # att-weighted lane reduce on the XLU. e[i, j] = att . lrelu(xl[j] + xr[i]).
    t = xl[None, :, :] + xr[:, None, :]          # [n, n, fdim]
    t = jnp.where(t > 0, t, 0.2 * t)             # leaky_relu(negative_slope=0.2)
    e = jnp.sum(att[None, :, :] * t, axis=-1)    # [n, n]

    # Masked softmax over source nodes (mask alone drives exp -> 0 for
    # binary adjacency with self-loops).
    e = jnp.where(mask, e, jnp.float32(-1e30))
    p = jnp.exp(e - jnp.max(e, axis=-1, keepdims=True))               # [n, n]
    denom = jnp.sum(p, axis=-1, keepdims=True)                        # [n, 1]

    # Aggregate with UNnormalized weights on the MXU, then rescale rows
    # (alpha never materialized; guard rows with zero in-degree).
    num = jnp.dot(p, xl, preferred_element_type=jnp.float32)          # [n, fdim]
    inv = pl.reciprocal(jnp.maximum(denom, jnp.float32(1e-30)), approx=True)
    out = num * inv + b_ref[...]
    if apply_elu:                                 # z1 = F.elu(conv1(x))
        out = jnp.where(out > 0, out, jnp.exp(out) - 1.0)
    return out


def _gat_decoder_kernel(x_ref, adj_ref, w1_ref, att1_ref, b1_ref,
                        w2_ref, att2_ref, b2_ref, out_ref):
    mask = adj_ref[...] > 0.0                     # computed once for both layers
    z1 = _gatv2_layer_body(x_ref[...], w1_ref, att1_ref, b1_ref, mask, True)
    z2 = _gatv2_layer_body(z1, w2_ref, att2_ref, b2_ref, mask, False)
    out_ref[...] = z2.astype(out_ref.dtype)


# ----------------------------------------------------------------------------
# Wrapper
# ----------------------------------------------------------------------------
def pack_gat_decoder_params(params):
    """One-time padding/packing of the decoder weights (hoisted out of forward)."""
    f1, h = params["w1_l"].shape
    f2 = params["w2_l"].shape[1]
    f1p = _round_up(f1, _LANE)
    hp = _round_up(h, _LANE)
    f2p = _round_up(f2, _LANE)

    w1 = jnp.zeros((f1p, 2 * hp), jnp.float32)
    w1 = w1.at[:f1, :h].set(params["w1_l"]).at[:f1, hp:hp + h].set(params["w1_r"])
    w2 = jnp.zeros((hp, 2 * f2p), jnp.float32)
    w2 = w2.at[:h, :f2].set(params["w2_l"]).at[:h, hp:hp + f2].set(params["w2_r"])

    packed = {
        "w1": w1,
        "att1": _pad2(params["att1"].astype(jnp.float32), 1, hp),
        "b1": _pad2(params["b1"].astype(jnp.float32), 1, hp),
        "w2": w2,
        "att2": _pad2(params["att2"].astype(jnp.float32), 1, f2p),
        "b2": _pad2(params["b2"].astype(jnp.float32), 1, f2p),
        "dims": (f1, f1p, h, hp, f2, f2p),
    }
    return packed


def gat_decoder_forward(x, adj, packed):
    """Fused z1 = elu(conv1(x)); z2 = conv2(z1) in a single pallas_call.

    `adj` must be a binary (0/1) dense adjacency with self-loops,
    adj[i, j] = 1 iff edge j -> i (PyG add_self_loops=True convention).
    """
    n = x.shape[0]
    f1, f1p, _h, _hp, f2, f2p = packed["dims"]
    n_p = _round_up(n, _SUBLANE)

    xp = _pad2(x.astype(jnp.float32), n_p, f1p)
    adjp = _pad2(adj.astype(jnp.float32), n_p, n_p)

    vmem = pl.BlockSpec(memory_space=pltpu.MemorySpace.VMEM)
    out = pl.pallas_call(
        _gat_decoder_kernel,
        out_shape=jax.ShapeDtypeStruct((n_p, f2p), jnp.float32),
        in_specs=[vmem] * 8,
        out_specs=vmem,
    )(xp, adjp, packed["w1"], packed["att1"], packed["b1"],
      packed["w2"], packed["att2"], packed["b2"])
    return out[:n, :f2]


# ----------------------------------------------------------------------------
# Pure-JAX reference (original un-padded math) for a correctness check.
# ----------------------------------------------------------------------------
def _gatv2_ref(x, wl, wr, att, bias, adj, apply_elu):
    xl = x @ wl
    xr = x @ wr
    e3 = xl[None, :, :] + xr[:, None, :]
    e3 = jnp.where(e3 > 0, e3, 0.2 * e3)
    e = jnp.sum(e3 * att[None, :, :], axis=-1)
    e = jnp.where(adj > 0, e, jnp.float32(-1e30))
    p = jnp.exp(e - jnp.max(e, axis=-1, keepdims=True)) * adj
    alpha = p / jnp.sum(p, axis=-1, keepdims=True)
    out = alpha @ xl + bias
    if apply_elu:
        out = jnp.where(out > 0, out, jnp.exp(out) - 1.0)
    return out


def _ref_forward(x, adj, params):
    z1 = _gatv2_ref(x, params["w1_l"], params["w1_r"], params["att1"],
                    params["b1"], adj, True)
    return _gatv2_ref(z1, params["w2_l"], params["w2_r"], params["att2"],
                      params["b2"], adj, False)


if __name__ == "__main__":
    # GAT_Decoder(n_latent, n_dim, heads=1, dropout=0)
    n_latent = 16
    n_dim = 8
    hidden = n_latent * 2            # conv1 output channels (heads=1, concat)
    num_nodes = 16

    key = jax.random.PRNGKey(0)
    keys = jax.random.split(key, 9)

    # Node features x: [N, n_latent]
    x = jax.random.normal(keys[0], (num_nodes, n_latent), dtype=jnp.float32)

    # Deterministic edge_index: bidirectional ring + a few extra edges.
    src = list(range(num_nodes)) + [(i + 1) % num_nodes for i in range(num_nodes)]
    dst = [(i + 1) % num_nodes for i in range(num_nodes)] + list(range(num_nodes))
    src += [0, 3, 7, 12]
    dst += [8, 11, 2, 5]
    edge_index = np.stack([np.array(src), np.array(dst)])  # [2, E]

    # Dense BINARY adjacency mask with self-loops (PyG add_self_loops=True).
    adj_np = np.zeros((num_nodes, num_nodes), dtype=np.float32)
    adj_np[edge_index[1], edge_index[0]] = 1.0  # edge j -> i stored at adj[i, j]
    np.fill_diagonal(adj_np, 1.0)
    adj = jnp.asarray(adj_np)

    def glorot(k, fan_in, fan_out):
        s = jnp.sqrt(2.0 / (fan_in + fan_out))
        return s * jax.random.normal(k, (fan_in, fan_out), dtype=jnp.float32)

    params = {
        # conv1: GATv2Conv(n_latent -> hidden), heads=1, concat=True
        "w1_l": glorot(keys[1], n_latent, hidden),
        "w1_r": glorot(keys[2], n_latent, hidden),
        "att1": 0.1 * jax.random.normal(keys[3], (1, hidden), dtype=jnp.float32),
        "b1": jnp.zeros((1, hidden), dtype=jnp.float32),
        # conv2: GATv2Conv(hidden -> n_dim), heads=1, concat=False
        "w2_l": glorot(keys[4], hidden, n_dim),
        "w2_r": glorot(keys[5], hidden, n_dim),
        "att2": 0.1 * jax.random.normal(keys[6], (1, n_dim), dtype=jnp.float32),
        "b2": jnp.zeros((1, n_dim), dtype=jnp.float32),
    }

    # Pack / pad weights ONCE (hoisted out of the per-call forward).
    packed = pack_gat_decoder_params(params)

    out = gat_decoder_forward(x, adj, packed)
    out = jax.block_until_ready(out)

    ref = _ref_forward(x, adj, params)
    np.testing.assert_allclose(np.asarray(out), np.asarray(ref),
                               rtol=1e-2, atol=1e-2)
    assert out.shape == (num_nodes, n_dim)

    print("KERNEL_OK")
</pallas_src>

<mosaic_0001>
module attributes {stable_mosaic.version = 11 : i64} {
  func.func @_gat_decoder_kernel(%arg0: memref<16x128xf32, #tpu.memory_space<vmem>>, %arg1: memref<16x16xf32, #tpu.memory_space<vmem>>, %arg2: memref<128x256xf32, #tpu.memory_space<vmem>>, %arg3: memref<1x128xf32, #tpu.memory_space<vmem>>, %arg4: memref<1x128xf32, #tpu.memory_space<vmem>>, %arg5: memref<128x256xf32, #tpu.memory_space<vmem>>, %arg6: memref<1x128xf32, #tpu.memory_space<vmem>>, %arg7: memref<1x128xf32, #tpu.memory_space<vmem>>, %arg8: memref<16x128xf32, #tpu.memory_space<vmem>>) attributes {dimension_semantics = [], scalar_prefetch = 0 : i64, scratch_operands = 0 : i64, tpu.core_type = #tpu.core_type<tc>} {
    %c0 = arith.constant 0 : index
    %c0_0 = arith.constant 0 : index
    %0 = vector.load %arg1[%c0, %c0_0] : memref<16x16xf32, #tpu.memory_space<vmem>>, vector<16x16xf32>
    %cst = arith.constant 0.000000e+00 : f32
    %1 = vector.broadcast %cst : f32 to vector<16x16xf32>
    %2 = arith.cmpf ogt, %0, %1 : vector<16x16xf32>
    %c0_1 = arith.constant 0 : index
    %c0_2 = arith.constant 0 : index
    %3 = vector.load %arg0[%c0_1, %c0_2] : memref<16x128xf32, #tpu.memory_space<vmem>>, vector<16x128xf32>
    %c0_3 = arith.constant 0 : index
    %c0_4 = arith.constant 0 : index
    %4 = vector.load %arg3[%c0_3, %c0_4] : memref<1x128xf32, #tpu.memory_space<vmem>>, vector<1x128xf32>
    %c0_5 = arith.constant 0 : index
    %c0_6 = arith.constant 0 : index
    %5 = vector.load %arg2[%c0_5, %c0_6] : memref<128x256xf32, #tpu.memory_space<vmem>>, vector<128x256xf32>
    %cst_7 = arith.constant dense<0.000000e+00> : vector<16x256xf32>
    %6 = tpu.matmul %3, %5, %cst_7 {dimension_numbers = #tpu.dot_dimension_numbers<[1], [0], [0], [1], [0, 0, 1, 1], [], []>} : vector<16x128xf32>, vector<128x256xf32>, vector<16x256xf32> -> vector<16x256xf32>
    %7 = vector.extract_strided_slice %6 {offsets = [0, 0], sizes = [16, 128], strides = [1, 1]} : vector<16x256xf32> to vector<16x128xf32>
    %8 = vector.extract_strided_slice %6 {offsets = [0, 128], sizes = [16, 128], strides = [1, 1]} : vector<16x256xf32> to vector<16x128xf32>
    %9 = vector.shape_cast %7 : vector<16x128xf32> to vector<1x16x128xf32>
    %10 = vector.shape_cast %8 : vector<16x128xf32> to vector<16x1x128xf32>
    %11 = vector.broadcast %9 : vector<1x16x128xf32> to vector<16x16x128xf32>
    %12 = vector.broadcast %10 : vector<16x1x128xf32> to vector<16x16x128xf32>
    %13 = arith.addf %11, %12 : vector<16x16x128xf32>
    %cst_8 = arith.constant 0.000000e+00 : f32
    %14 = vector.broadcast %cst_8 : f32 to vector<16x16x128xf32>
    %15 = arith.cmpf ogt, %13, %14 : vector<16x16x128xf32>
    %cst_9 = arith.constant 2.000000e-01 : f32
    %16 = vector.broadcast %cst_9 : f32 to vector<16x16x128xf32>
    %17 = arith.mulf %16, %13 : vector<16x16x128xf32>
    %18 = arith.select %15, %13, %17 : vector<16x16x128xi1>, vector<16x16x128xf32>
    %19 = vector.shape_cast %4 : vector<1x128xf32> to vector<1x1x128xf32>
    %20 = vector.broadcast %19 : vector<1x1x128xf32> to vector<16x16x128xf32>
    %21 = arith.mulf %20, %18 : vector<16x16x128xf32>
    %cst_10 = arith.constant dense<0.000000e+00> : vector<16x16xf32>
    %22 = vector.multi_reduction <add>, %21, %cst_10 [2] : vector<16x16x128xf32> to vector<16x16xf32>
    %cst_11 = arith.constant -1.000000e+30 : f32
    %23 = vector.broadcast %cst_11 : f32 to vector<16x16xf32>
    %24 = arith.select %2, %22, %23 : vector<16x16xi1>, vector<16x16xf32>
    %cst_12 = arith.constant dense<0xFF800000> : vector<16xf32>
    %25 = vector.multi_reduction <maximumf>, %24, %cst_12 [1] : vector<16x16xf32> to vector<16xf32>
    %26 = vector.shape_cast %25 : vector<16xf32> to vector<16x1xf32>
    %27 = vector.broadcast %26 : vector<16x1xf32> to vector<16x16xf32>
    %28 = arith.subf %24, %27 : vector<16x16xf32>
    %29 = math.exp %28 : vector<16x16xf32>
    %cst_13 = arith.constant dense<0.000000e+00> : vector<16xf32>
    %30 = vector.multi_reduction <add>, %29, %cst_13 [1] : vector<16x16xf32> to vector<16xf32>
    %31 = vector.shape_cast %30 : vector<16xf32> to vector<16x1xf32>
    %cst_14 = arith.constant dense<0.000000e+00> : vector<16x128xf32>
    %32 = tpu.matmul %29, %7, %cst_14 {dimension_numbers = #tpu.dot_dimension_numbers<[1], [0], [0], [1], [0, 0, 1, 1], [], []>} : vector<16x16xf32>, vector<16x128xf32>, vector<16x128xf32> -> vector<16x128xf32>
    %cst_15 = arith.constant 1.000000e-30 : f32
    %33 = vector.broadcast %cst_15 : f32 to vector<16x1xf32>
    %34 = arith.maximumf %31, %33 : vector<16x1xf32>
    %35 = tpu.reciprocal %34 {approx = true} : vector<16x1xf32> -> vector<16x1xf32>
    %36 = vector.broadcast %35 : vector<16x1xf32> to vector<16x128xf32>
    %37 = arith.mulf %32, %36 : vector<16x128xf32>
    %c0_16 = arith.constant 0 : index
    %c0_17 = arith.constant 0 : index
    %38 = vector.load %arg4[%c0_16, %c0_17] : memref<1x128xf32, #tpu.memory_space<vmem>>, vector<1x128xf32>
    %39 = vector.broadcast %38 : vector<1x128xf32> to vector<16x128xf32>
    %40 = arith.addf %37, %39 : vector<16x128xf32>
    %cst_18 = arith.constant 0.000000e+00 : f32
    %41 = vector.broadcast %cst_18 : f32 to vector<16x128xf32>
    %42 = arith.cmpf ogt, %40, %41 : vector<16x128xf32>
    %43 = math.exp %40 : vector<16x128xf32>
    %cst_19 = arith.constant 1.000000e+00 : f32
    %44 = vector.broadcast %cst_19 : f32 to vector<16x128xf32>
    %45 = arith.subf %43, %44 : vector<16x128xf32>
    %46 = arith.select %42, %40, %45 : vector<16x128xi1>, vector<16x128xf32>
    %c0_20 = arith.constant 0 : index
    %c0_21 = arith.constant 0 : index
    %47 = vector.load %arg6[%c0_20, %c0_21] : memref<1x128xf32, #tpu.memory_space<vmem>>, vector<1x128xf32>
    %c0_22 = arith.constant 0 : index
    %c0_23 = arith.constant 0 : index
    %48 = vector.load %arg5[%c0_22, %c0_23] : memref<128x256xf32, #tpu.memory_space<vmem>>, vector<128x256xf32>
    %cst_24 = arith.constant dense<0.000000e+00> : vector<16x256xf32>
    %49 = tpu.matmul %46, %48, %cst_24 {dimension_numbers = #tpu.dot_dimension_numbers<[1], [0], [0], [1], [0, 0, 1, 1], [], []>} : vector<16x128xf32>, vector<128x256xf32>, vector<16x256xf32> -> vector<16x256xf32>
    %50 = vector.extract_strided_slice %49 {offsets = [0, 0], sizes = [16, 128], strides = [1, 1]} : vector<16x256xf32> to vector<16x128xf32>
    %51 = vector.extract_strided_slice %49 {offsets = [0, 128], sizes = [16, 128], strides = [1, 1]} : vector<16x256xf32> to vector<16x128xf32>
    %52 = vector.shape_cast %50 : vector<16x128xf32> to vector<1x16x128xf32>
    %53 = vector.shape_cast %51 : vector<16x128xf32> to vector<16x1x128xf32>
    %54 = vector.broadcast %52 : vector<1x16x128xf32> to vector<16x16x128xf32>
    %55 = vector.broadcast %53 : vector<16x1x128xf32> to vector<16x16x128xf32>
    %56 = arith.addf %54, %55 : vector<16x16x128xf32>
    %cst_25 = arith.constant 0.000000e+00 : f32
    %57 = vector.broadcast %cst_25 : f32 to vector<16x16x128xf32>
    %58 = arith.cmpf ogt, %56, %57 : vector<16x16x128xf32>
    %cst_26 = arith.constant 2.000000e-01 : f32
    %59 = vector.broadcast %cst_26 : f32 to vector<16x16x128xf32>
    %60 = arith.mulf %59, %56 : vector<16x16x128xf32>
    %61 = arith.select %58, %56, %60 : vector<16x16x128xi1>, vector<16x16x128xf32>
    %62 = vector.shape_cast %47 : vector<1x128xf32> to vector<1x1x128xf32>
    %63 = vector.broadcast %62 : vector<1x1x128xf32> to vector<16x16x128xf32>
    %64 = arith.mulf %63, %61 : vector<16x16x128xf32>
    %cst_27 = arith.constant dense<0.000000e+00> : vector<16x16xf32>
    %65 = vector.multi_reduction <add>, %64, %cst_27 [2] : vector<16x16x128xf32> to vector<16x16xf32>
    %cst_28 = arith.constant -1.000000e+30 : f32
    %66 = vector.broadcast %cst_28 : f32 to vector<16x16xf32>
    %67 = arith.select %2, %65, %66 : vector<16x16xi1>, vector<16x16xf32>
    %cst_29 = arith.constant dense<0xFF800000> : vector<16xf32>
    %68 = vector.multi_reduction <maximumf>, %67, %cst_29 [1] : vector<16x16xf32> to vector<16xf32>
    %69 = vector.shape_cast %68 : vector<16xf32> to vector<16x1xf32>
    %70 = vector.broadcast %69 : vector<16x1xf32> to vector<16x16xf32>
    %71 = arith.subf %67, %70 : vector<16x16xf32>
    %72 = math.exp %71 : vector<16x16xf32>
    %cst_30 = arith.constant dense<0.000000e+00> : vector<16xf32>
    %73 = vector.multi_reduction <add>, %72, %cst_30 [1] : vector<16x16xf32> to vector<16xf32>
    %74 = vector.shape_cast %73 : vector<16xf32> to vector<16x1xf32>
    %cst_31 = arith.constant dense<0.000000e+00> : vector<16x128xf32>
    %75 = tpu.matmul %72, %50, %cst_31 {dimension_numbers = #tpu.dot_dimension_numbers<[1], [0], [0], [1], [0, 0, 1, 1], [], []>} : vector<16x16xf32>, vector<16x128xf32>, vector<16x128xf32> -> vector<16x128xf32>
    %cst_32 = arith.constant 1.000000e-30 : f32
    %76 = vector.broadcast %cst_32 : f32 to vector<16x1xf32>
    %77 = arith.maximumf %74, %76 : vector<16x1xf32>
    %78 = tpu.reciprocal %77 {approx = true} : vector<16x1xf32> -> vector<16x1xf32>
    %79 = vector.broadcast %78 : vector<16x1xf32> to vector<16x128xf32>
    %80 = arith.mulf %75, %79 : vector<16x128xf32>
    %c0_33 = arith.constant 0 : index
    %c0_34 = arith.constant 0 : index
    %81 = vector.load %arg7[%c0_33, %c0_34] : memref<1x128xf32, #tpu.memory_space<vmem>>, vector<1x128xf32>
    %82 = vector.broadcast %81 : vector<1x128xf32> to vector<16x128xf32>
    %83 = arith.addf %80, %82 : vector<16x128xf32>
    %c0_35 = arith.constant 0 : index
    %c0_36 = arith.constant 0 : index
    %84 = vector.load %arg8[%c0_35, %c0_36] : memref<16x128xf32, #tpu.memory_space<vmem>>, vector<16x128xf32>
    tpu.vector_store %arg8[%c0_35, %c0_36], %83 {strides = array<i32>} : memref<16x128xf32, #tpu.memory_space<vmem>>, vector<16x128xf32>,
    return
  }
}

</mosaic_0001>

<llo_original>
// kernel: tpu_custom_call.1
$region0: #{tpu_custom_call.1}
  #allocation0 [shape = 'u32[]', space=smem, size = 0x4, offset = 0x4, fixed_abs, tag = 'smem constant byte address 0x4 - core index']
  #allocation1 [shape = 'u32[144,128]{1,0:T(1,128)}', space=vmem, size = 0x12000, scoped, tag = 'internal scratch']
  %s0 = inlined_call_operand.hbm [shape: f32[16,128], index: 0, kind: input, shape index: {}]
  %s1 = inlined_call_operand.hbm [shape: f32[16,16], index: 1, kind: input, shape index: {}]
  %s2 = inlined_call_operand.hbm [shape: f32[128,256], index: 2, kind: input, shape index: {}]
  %s3 = inlined_call_operand.vmem [shape: f32[1,128], index: 3, kind: input, shape index: {}]
  %s4 = inlined_call_operand.vmem [shape: f32[1,128], index: 4, kind: input, shape index: {}]
  %s5 = inlined_call_operand.hbm [shape: f32[128,256], index: 5, kind: input, shape index: {}]
  %s6 = inlined_call_operand.vmem [shape: f32[1,128], index: 6, kind: input, shape index: {}]
  %s7 = inlined_call_operand.vmem [shape: f32[1,128], index: 7, kind: input, shape index: {}]
  %s8 = inlined_call_operand.hbm [shape: f32[16,128], index: 8, kind: output, shape index: {}]
  %s9 = sld [smem:[#allocation0]]
  $region58: #{tpu_custom_call.1} parent=0
    _
  %s11 = ssub.s32 1, %s9
  %s12 = scalar_select 0, %s11, %s9
  $region1: #{tpu_custom_call.1} parent=0
    #allocation2 [shape = 'u8[8192]{0}', space=vmem, size = 0x2000, scoped, tag = 'input window, operand 0, single buffered']
    #allocation3 [shape = 's32[1]{0}', space=sflag, size = 0x4, scoped, tag = 'scoped memory for tpu_custom_call.1']
    #allocation4 [shape = 's32[1]{0}', space=sflag, size = 0x4, scoped, tag = 'scoped memory for tpu_custom_call.1']
    #allocation5 [shape = 'u8[8192]{0}', space=vmem, size = 0x2000, scoped, tag = 'input window, operand 1, single buffered']
    #allocation6 [shape = 's32[1]{0}', space=sflag, size = 0x4, scoped, tag = 'scoped memory for tpu_custom_call.1']
    #allocation7 [shape = 'u8[131072]{0}', space=vmem, size = 0x20000, scoped, tag = 'input window, operand 2, single buffered']
    #allocation8 [shape = 'u8[131072]{0}', space=vmem, size = 0x20000, scoped, tag = 'input window, operand 5, single buffered']
    #allocation9 [shape = 's32[1]{0}', space=sflag, size = 0x4, scoped, tag = 'scoped memory for tpu_custom_call.1']
    #allocation10 [shape = 'u8[8192]{0}', space=vmem, size = 0x2000, scoped, tag = 'output window, operand 0, single buffered']
    %13 = vsyncpa [#allocation3], 0
    %14 = vsyncpa [#allocation6], 0
    %15 = vsyncpa [#allocation9], 0
    %16 = vsyncpa [#allocation4], 0
    // Predicated region
    $region2: #{tpu_custom_call.1} parent=1 // pred_check
      _
    $region3: #{tpu_custom_call.1} parent=1 // pred_check_branch
      %18 = sbr.rel (0) target = $region5
    $region4: #{tpu_custom_call.1} parent=1 // pred_region
      %s20 = ssub.s32 256, 256
      %21 = vsyncadd [#allocation3], %s20
      %s22 = sshll.u32 [#allocation2], 4
      %s23 = int_to_ptr.vmem [resolvable:$true] %s22
      %28 = dma.hbm_to_vmem [thread:$0]  %s0, 256, %s23, [#allocation3], 128, 128, 8
    $region5: #{tpu_custom_call.1} parent=1 // pred_fallthru
      _
    // Predicated region
    $region6: #{tpu_custom_call.1} parent=1 // pred_check
      _
    $region7: #{tpu_custom_call.1} parent=1 // pred_check_branch
      %30 = sbr.rel (0) target = $region9
    $region8: #{tpu_custom_call.1} parent=1 // pred_region
      %s32 = ssub.s32 256, 256
      %33 = vsyncadd [#allocation6], %s32
      %s34 = sshll.u32 [#allocation5], 4
      %s35 = int_to_ptr.vmem [resolvable:$true] %s34
      %40 = dma.hbm_to_vmem [thread:$0]  %s1, 256, %s35, [#allocation6], 128, 128, 8
    $region9: #{tpu_custom_call.1} parent=1 // pred_fallthru
      _
    // Predicated region
    $region10: #{tpu_custom_call.1} parent=1 // pred_check
      _
    $region11: #{tpu_custom_call.1} parent=1 // pred_check_branch
      %42 = sbr.rel (0) target = $region13
    $region12: #{tpu_custom_call.1} parent=1 // pred_region
      %s44 = ssub.s32 4096, 4096
      %45 = vsyncadd [#allocation6], %s44
      %s46 = sshll.u32 [#allocation7], 4
      %s47 = int_to_ptr.vmem [resolvable:$true] %s46
      %52 = dma.hbm_to_vmem [thread:$0]  %s2, 4096, %s47, [#allocation6], 256, 256, 16
    $region13: #{tpu_custom_call.1} parent=1 // pred_fallthru
      _
    // Predicated region
    $region14: #{tpu_custom_call.1} parent=1 // pred_check
      _
    $region15: #{tpu_custom_call.1} parent=1 // pred_check_branch
      %54 = sbr.rel (0) target = $region17
    $region16: #{tpu_custom_call.1} parent=1 // pred_region
      _
    $region17: #{tpu_custom_call.1} parent=1 // pred_fallthru
      _
    // Predicated region
    $region18: #{tpu_custom_call.1} parent=1 // pred_check
      _
    $region19: #{tpu_custom_call.1} parent=1 // pred_check_branch
      %56 = sbr.rel (0) target = $region21
    $region20: #{tpu_custom_call.1} parent=1 // pred_region
      _
    $region21: #{tpu_custom_call.1} parent=1 // pred_fallthru
      _
    // Predicated region
    $region22: #{tpu_custom_call.1} parent=1 // pred_check
      _
    $region23: #{tpu_custom_call.1} parent=1 // pred_check_branch
      %58 = sbr.rel (0) target = $region25
    $region24: #{tpu_custom_call.1} parent=1 // pred_region
      %s60 = ssub.s32 4096, 4096
      %61 = vsyncadd [#allocation9], %s60
      %s62 = sshll.u32 [#allocation8], 4
      %s63 = int_to_ptr.vmem [resolvable:$true] %s62
      %68 = dma.hbm_to_vmem [thread:$0]  %s5, 4096, %s63, [#allocation9], 256, 256, 16
    $region25: #{tpu_custom_call.1} parent=1 // pred_fallthru
      _
    // Predicated region
    $region26: #{tpu_custom_call.1} parent=1 // pred_check
      _
    $region27: #{tpu_custom_call.1} parent=1 // pred_check_branch
      %70 = sbr.rel (0) target = $region29
    $region28: #{tpu_custom_call.1} parent=1 // pred_region
      _
    $region29: #{tpu_custom_call.1} parent=1 // pred_fallthru
      _
    // Predicated region
    $region30: #{tpu_custom_call.1} parent=1 // pred_check
      _
    $region31: #{tpu_custom_call.1} parent=1 // pred_check_branch
      %72 = sbr.rel (0) target = $region33
    $region32: #{tpu_custom_call.1} parent=1 // pred_region
      _
    $region33: #{tpu_custom_call.1} parent=1 // pred_fallthru
      _
    // Predicated region
    $region34: #{tpu_custom_call.1} parent=1 // pred_check
      _
    $region35: #{tpu_custom_call.1} parent=1 // pred_check_branch
      %74 = sbr.rel (0) target = $region37
    $region36: #{tpu_custom_call.1} parent=1 // pred_region
      %75 = dma.done [#allocation3], 256
    $region37: #{tpu_custom_call.1} parent=1 // pred_fallthru
      _
    // Predicated region
    $region38: #{tpu_custom_call.1} parent=1 // pred_check
      _
    $region39: #{tpu_custom_call.1} parent=1 // pred_check_branch
      %77 = sbr.rel (0) target = $region41
    $region40: #{tpu_custom_call.1} parent=1 // pred_region
      %78 = dma.done [#allocation6], 256
    $region41: #{tpu_custom_call.1} parent=1 // pred_fallthru
      _
    // Predicated region
    $region42: #{tpu_custom_call.1} parent=1 // pred_check
      _
    $region43: #{tpu_custom_call.1} parent=1 // pred_check_branch
      %80 = sbr.rel (0) target = $region45
    $region44: #{tpu_custom_call.1} parent=1 // pred_region
      %81 = dma.done [#allocation6], 4096
    $region45: #{tpu_custom_call.1} parent=1 // pred_fallthru
      _
    // Predicated region
    $region46: #{tpu_custom_call.1} parent=1 // pred_check
      _
    $region47: #{tpu_custom_call.1} parent=1 // pred_check_branch
      %83 = sbr.rel (0) target = $region49
    $region48: #{tpu_custom_call.1} parent=1 // pred_region
      %84 = dma.done [#allocation9], 4096
    $region49: #{tpu_custom_call.1} parent=1 // pred_fallthru
      _
    %v85 = vld [vmem:[#allocation5] sm:$0xff]
    %v86 = vld [vmem:[#allocation5 + $0x8] sm:$0xff]
    %vm87 = vcmp.gt.f32.partialorder %v85, 0.0
    %vm88 = vcmp.gt.f32.partialorder %v86, 0.0
    %v89 = vld [vmem:[#allocation2] sm:$0xff]
    %v90 = vld [vmem:[#allocation2 + $0x8] sm:$0xff]
    %v91 = vld [vmem:[%s3] sm:$0x1]
    %v92 = vld [vmem:[#allocation7] sm:$0xff]
    %v93 = vld [vmem:[#allocation7 + $0x8] sm:$0xff]
    %v94 = vld [vmem:[#allocation7 + $0x10] sm:$0xff]
    %v95 = vld [vmem:[#allocation7 + $0x18] sm:$0xff]
    %v96 = vld [vmem:[#allocation7 + $0x20] sm:$0xff]
    %v97 = vld [vmem:[#allocation7 + $0x28] sm:$0xff]
    %v98 = vld [vmem:[#allocation7 + $0x30] sm:$0xff]
    %v99 = vld [vmem:[#allocation7 + $0x38] sm:$0xff]
    %v100 = vld [vmem:[#allocation7 + $0x40] sm:$0xff]
    %v101 = vld [vmem:[#allocation7 + $0x48] sm:$0xff]
    %v102 = vld [vmem:[#allocation7 + $0x50] sm:$0xff]
    %v103 = vld [vmem:[#allocation7 + $0x58] sm:$0xff]
    %v104 = vld [vmem:[#allocation7 + $0x60] sm:$0xff]
    %v105 = vld [vmem:[#allocation7 + $0x68] sm:$0xff]
    %v106 = vld [vmem:[#allocation7 + $0x70] sm:$0xff]
    %v107 = vld [vmem:[#allocation7 + $0x78] sm:$0xff]
    %v108 = vld [vmem:[#allocation7 + $0x80] sm:$0xff]
    %v109 = vld [vmem:[#allocation7 + $0x88] sm:$0xff]
    %v110 = vld [vmem:[#allocation7 + $0x90] sm:$0xff]
    %v111 = vld [vmem:[#allocation7 + $0x98] sm:$0xff]
    %v112 = vld [vmem:[#allocation7 + $0xa0] sm:$0xff]
    %v113 = vld [vmem:[#allocation7 + $0xa8] sm:$0xff]
    %v114 = vld [vmem:[#allocation7 + $0xb0] sm:$0xff]
    %v115 = vld [vmem:[#allocation7 + $0xb8] sm:$0xff]
    %v116 = vld [vmem:[#allocation7 + $0xc0] sm:$0xff]
    %v117 = vld [vmem:[#allocation7 + $0xc8] sm:$0xff]
    %v118 = vld [vmem:[#allocation7 + $0xd0] sm:$0xff]
    %v119 = vld [vmem:[#allocation7 + $0xd8] sm:$0xff]
    %v120 = vld [vmem:[#allocation7 + $0xe0] sm:$0xff]
    %v121 = vld [vmem:[#allocation7 + $0xe8] sm:$0xff]
    %v122 = vld [vmem:[#allocation7 + $0xf0] sm:$0xff]
    %v123 = vld [vmem:[#allocation7 + $0xf8] sm:$0xff]
    %124 = vmatprep.subr.mxu0 %v93
    %125 = vmatpush1.msra.mxu0 %v92
    %126 = vmatprep.subr.mxu0 %v95
    %127 = vmatpush1.msra.mxu0 %v94
    %128 = vmatprep.subr.mxu0 %v97
    %129 = vmatpush1.msra.mxu0 %v96
    %130 = vmatprep.subr.mxu0 %v99
    %131 = vmatpush1.msra.mxu0 %v98
    %132 = vmatprep.subr.mxu0 %v101
    %133 = vmatpush1.msra.mxu0 %v100
    %134 = vmatprep.subr.mxu0 %v103
    %135 = vmatpush1.msra.mxu0 %v102
    %136 = vmatprep.subr.mxu0 %v105
    %137 = vmatpush1.msra.mxu0 %v104
    %138 = vmatprep.subr.mxu0 %v107
    %139 = vmatpush1.msra.mxu0 %v106
    %140 = vmatprep.subr.mxu0 %v109
    %141 = vmatpush1.msra.mxu0 %v108
    %142 = vmatprep.subr.mxu0 %v111
    %143 = vmatpush1.msra.mxu0 %v110
    %144 = vmatprep.subr.mxu0 %v113
    %145 = vmatpush1.msra.mxu0 %v112
    %146 = vmatprep.subr.mxu0 %v115
    %147 = vmatpush1.msra.mxu0 %v114
    %148 = vmatprep.subr.mxu0 %v117
    %149 = vmatpush1.msra.mxu0 %v116
    %150 = vmatprep.subr.mxu0 %v119
    %151 = vmatpush1.msra.mxu0 %v118
    %152 = vmatprep.subr.mxu0 %v121
    %153 = vmatpush1.msra.mxu0 %v120
    %154 = vmatprep.subr.mxu0 %v123
    %155 = vmatpush1.msra.mxu0 %v122
    %156 = vmatprep.subr.mxu0 0.0
    %157 = vmatpush1.msra.mxu0 0.0
    %158 = vmatprep.subr.mxu0 0.0
    %159 = vmatpush1.msra.mxu0 0.0
    %160 = vmatprep.subr.mxu0 0.0
    %161 = vmatpush1.msra.mxu0 0.0
    %162 = vmatprep.subr.mxu0 0.0
    %163 = vmatpush1.msra.mxu0 0.0
    %164 = vmatprep.subr.mxu0 0.0
    %165 = vmatpush1.msra.mxu0 0.0
    %166 = vmatprep.subr.mxu0 0.0
    %167 = vmatpush1.msra.mxu0 0.0
    %168 = vmatprep.subr.mxu0 0.0
    %169 = vmatpush1.msra.mxu0 0.0
    %170 = vmatprep.subr.mxu0 0.0
    %171 = vmatpush1.msra.mxu0 0.0
    %172 = vmatprep.subr.mxu0 0.0
    %173 = vmatpush1.msra.mxu0 0.0
    %174 = vmatprep.subr.mxu0 0.0
    %175 = vmatpush1.msra.mxu0 0.0
    %176 = vmatprep.subr.mxu0 0.0
    %177 = vmatpush1.msra.mxu0 0.0
    %178 = vmatprep.subr.mxu0 0.0
    %179 = vmatpush1.msra.mxu0 0.0
    %180 = vmatprep.subr.mxu0 0.0
    %181 = vmatpush1.msra.mxu0 0.0
    %182 = vmatprep.subr.mxu0 0.0
    %183 = vmatpush1.msra.mxu0 0.0
    %184 = vmatprep.subr.mxu0 0.0
    %185 = vmatpush1.msra.mxu0 0.0
    %186 = vmatprep.subr.mxu0 0.0
    %187 = vmatpush1.msra.mxu0 0.0
    %188 = vmatprep.mubr.f32.mxu0 0.0
    %189 = vmatmul.mubr.f32.gmra.mrb[0].mxu0 %v89
    %v190 = vpop.f32.mrb[0].mxu0
    %v191 = vadd.f32 0.0, %v190
    %v192 = vpop.f32.mrb[0].mxu0
    %v193 = vadd.f32 0.0, %v192
    %194 = vmatprep.mubr.f32.mxu0 0.0
    %195 = vmatmul.mubr.f32.gmra.mrb[0].mxu0 %v90
    %v196 = vpop.f32.mrb[0].mxu0
    %v197 = vadd.f32 0.0, %v196
    %v198 = vpop.f32.mrb[0].mxu0
    %v199 = vadd.f32 0.0, %v198
    %200 = vdwg.mxu0
    %v203 = vcombine.high %v193, %v193
    %v205 = vunpack.c.l.s4 1966171168
    %v206 = vunpack.c.0.s8 %v205
    %v207 = vlaneseq
    %v208 = vshrl.u32 %v207, 7
    %v209 = vsub.s32 %v206, %v208
    %v210 = vrot.slane %v193, %v209
    %v212 = vunpack.c.l.s4 1966171168
    %v213 = vunpack.c.0.s8 %v212
    %v214 = vlaneseq
    %v215 = vshrl.u32 %v214, 7
    %v216 = vsub.s32 %v213, %v215
    %v217 = vrot.slane %v203, %v216
    %v218 = vcombine.high %v210, %v210
    %v219 = vcombine.high %v217, %v217
    %v221 = vunpack.c.l.s4 1966171168
    %v222 = vunpack.c.0.s8 %v221
    %v223 = vlaneseq
    %v224 = vshrl.u32 %v223, 7
    %v225 = vsub.s32 %v222, %v224
    %v226 = vrot.slane %v210, %v225
    %v228 = vunpack.c.l.s4 1966171168
    %v229 = vunpack.c.0.s8 %v228
    %v230 = vlaneseq
    %v231 = vshrl.u32 %v230, 7
    %v232 = vsub.s32 %v229, %v231
    %v233 = vrot.slane %v217, %v232
    %v235 = vunpack.c.l.s4 1966171168
    %v236 = vunpack.c.0.s8 %v235
    %v237 = vlaneseq
    %v238 = vshrl.u32 %v237, 7
    %v239 = vsub.s32 %v236, %v238
    %v240 = vrot.slane %v218, %v239
    %v242 = vunpack.c.l.s4 1966171168
    %v243 = vunpack.c.0.s8 %v242
    %v244 = vlaneseq
    %v245 = vshrl.u32 %v244, 7
    %v246 = vsub.s32 %v243, %v245
    %v247 = vrot.slane %v219, %v246
    %v248 = vcombine.high %v226, %v226
    %v249 = vcombine.high %v233, %v233
    %v250 = vcombine.high %v240, %v240
    %v251 = vcombine.high %v247, %v247
    %v252 = vcombine.high %v199, %v199
    %v254 = vunpack.c.l.s4 1966171168
    %v255 = vunpack.c.0.s8 %v254
    %v256 = vlaneseq
    %v257 = vshrl.u32 %v256, 7
    %v258 = vsub.s32 %v255, %v257
    %v259 = vrot.slane %v199, %v258
    %v261 = vunpack.c.l.s4 1966171168
    %v262 = vunpack.c.0.s8 %v261
    %v263 = vlaneseq
    %v264 = vshrl.u32 %v263, 7
    %v265 = vsub.s32 %v262, %v264
    %v266 = vrot.slane %v252, %v265
    %v267 = vcombine.high %v259, %v259
    %v268 = vcombine.high %v266, %v266
    %v270 = vunpack.c.l.s4 1966171168
    %v271 = vunpack.c.0.s8 %v270
    %v272 = vlaneseq
    %v273 = vshrl.u32 %v272, 7
    %v274 = vsub.s32 %v271, %v273
    %v275 = vrot.slane %v259, %v274
    %v277 = vunpack.c.l.s4 1966171168
    %v278 = vunpack.c.0.s8 %v277
    %v279 = vlaneseq
    %v280 = vshrl.u32 %v279, 7
    %v281 = vsub.s32 %v278, %v280
    %v282 = vrot.slane %v266, %v281
    %v284 = vunpack.c.l.s4 1966171168
    %v285 = vunpack.c.0.s8 %v284
    %v286 = vlaneseq
    %v287 = vshrl.u32 %v286, 7
    %v288 = vsub.s32 %v285, %v287
    %v289 = vrot.slane %v267, %v288
    %v291 = vunpack.c.l.s4 1966171168
    %v292 = vunpack.c.0.s8 %v291
    %v293 = vlaneseq
    %v294 = vshrl.u32 %v293, 7
    %v295 = vsub.s32 %v292, %v294
    %v296 = vrot.slane %v268, %v295
    %v297 = vcombine.high %v275, %v275
    %v298 = vcombine.high %v282, %v282
    %v299 = vcombine.high %v289, %v289
    %v300 = vcombine.high %v296, %v296
    %v301 = vlaneseq
    %v302 = vshrl.u32 %v301, 7
    %v303 = vsub.s32 0, %v302
    %v304 = vrot.slane %v226, %v303
    %v305 = vlaneseq
    %v306 = vshrl.u32 %v305, 7
    %v307 = vsub.s32 0, %v306
    %v308 = vrot.slane %v240, %v307
    %v309 = vlaneseq
    %v310 = vshrl.u32 %v309, 7
    %v311 = vsub.s32 0, %v310
    %v312 = vrot.slane %v248, %v311
    %v313 = vlaneseq
    %v314 = vshrl.u32 %v313, 7
    %v315 = vsub.s32 0, %v314
    %v316 = vrot.slane %v250, %v315
    %v317 = vlaneseq
    %v318 = vshrl.u32 %v317, 7
    %v319 = vsub.s32 0, %v318
    %v320 = vrot.slane %v233, %v319
    %v321 = vlaneseq
    %v322 = vshrl.u32 %v321, 7
    %v323 = vsub.s32 0, %v322
    %v324 = vrot.slane %v247, %v323
    %v325 = vlaneseq
    %v326 = vshrl.u32 %v325, 7
    %v327 = vsub.s32 0, %v326
    %v328 = vrot.slane %v249, %v327
    %v329 = vlaneseq
    %v330 = vshrl.u32 %v329, 7
    %v331 = vsub.s32 0, %v330
    %v332 = vrot.slane %v251, %v331
    %v333 = vlaneseq
    %v334 = vshrl.u32 %v333, 7
    %v335 = vsub.s32 0, %v334
    %v336 = vrot.slane %v275, %v335
    %v337 = vlaneseq
    %v338 = vshrl.u32 %v337, 7
    %v339 = vsub.s32 0, %v338
    %v340 = vrot.slane %v289, %v339
    %v341 = vlaneseq
    %v342 = vshrl.u32 %v341, 7
    %v343 = vsub.s32 0, %v342
    %v344 = vrot.slane %v297, %v343
    %v345 = vlaneseq
    %v346 = vshrl.u32 %v345, 7
    %v347 = vsub.s32 0, %v346
    %v348 = vrot.slane %v299, %v347
    %v349 = vlaneseq
    %v350 = vshrl.u32 %v349, 7
    %v351 = vsub.s32 0, %v350
    %v352 = vrot.slane %v282, %v351
    %v353 = vlaneseq
    %v354 = vshrl.u32 %v353, 7
    %v355 = vsub.s32 0, %v354
    %v356 = vrot.slane %v296, %v355
    %v357 = vlaneseq
    %v358 = vshrl.u32 %v357, 7
    %v359 = vsub.s32 0, %v358
    %v360 = vrot.slane %v298, %v359
    %v361 = vlaneseq
    %v362 = vshrl.u32 %v361, 7
    %v363 = vsub.s32 0, %v362
    %v364 = vrot.slane %v300, %v363
    %v381 = vadd.f32 %v191, %v304
    %v382 = vadd.f32 %v197, %v304
    %v383 = vadd.f32 %v191, %v308
    %v384 = vadd.f32 %v197, %v308
    %v385 = vadd.f32 %v191, %v312
    %v386 = vadd.f32 %v197, %v312
    %v387 = vadd.f32 %v191, %v316
    %v388 = vadd.f32 %v197, %v316
    %v389 = vadd.f32 %v191, %v320
    %v390 = vadd.f32 %v197, %v320
    %v391 = vadd.f32 %v191, %v324
    %v392 = vadd.f32 %v197, %v324
    %v393 = vadd.f32 %v191, %v328
    %v394 = vadd.f32 %v197, %v328
    %v395 = vadd.f32 %v191, %v332
    %v396 = vadd.f32 %v197, %v332
    %v397 = vadd.f32 %v191, %v336
    %v398 = vadd.f32 %v197, %v336
    %v399 = vadd.f32 %v191, %v340
    %v400 = vadd.f32 %v197, %v340
    %v401 = vadd.f32 %v191, %v344
    %v402 = vadd.f32 %v197, %v344
    %v403 = vadd.f32 %v191, %v348
    %v404 = vadd.f32 %v197, %v348
    %v405 = vadd.f32 %v191, %v352
    %v406 = vadd.f32 %v197, %v352
    %v407 = vadd.f32 %v191, %v356
    %v408 = vadd.f32 %v197, %v356
    %v409 = vadd.f32 %v191, %v360
    %v410 = vadd.f32 %v197, %v360
    %v411 = vadd.f32 %v191, %v364
    %v412 = vadd.f32 %v197, %v364
    %vm413 = vcmp.gt.f32.partialorder %v381, 0.0
    %vm414 = vcmp.gt.f32.partialorder %v382, 0.0
    %vm415 = vcmp.gt.f32.partialorder %v383, 0.0
    %vm416 = vcmp.gt.f32.partialorder %v384, 0.0
    %vm417 = vcmp.gt.f32.partialorder %v385, 0.0
    %vm418 = vcmp.gt.f32.partialorder %v386, 0.0
    %vm419 = vcmp.gt.f32.partialorder %v387, 0.0
    %vm420 = vcmp.gt.f32.partialorder %v388, 0.0
    %vm421 = vcmp.gt.f32.partialorder %v389, 0.0
    %vm422 = vcmp.gt.f32.partialorder %v390, 0.0
    %vm423 = vcmp.gt.f32.partialorder %v391, 0.0
    %vm424 = vcmp.gt.f32.partialorder %v392, 0.0
    %vm425 = vcmp.gt.f32.partialorder %v393, 0.0
    %vm426 = vcmp.gt.f32.partialorder %v394, 0.0
    %vm427 = vcmp.gt.f32.partialorder %v395, 0.0
    %vm428 = vcmp.gt.f32.partialorder %v396, 0.0
    %vm429 = vcmp.gt.f32.partialorder %v397, 0.0
    %vm430 = vcmp.gt.f32.partialorder %v398, 0.0
    %vm431 = vcmp.gt.f32.partialorder %v399, 0.0
    %vm432 = vcmp.gt.f32.partialorder %v400, 0.0
    %vm433 = vcmp.gt.f32.partialorder %v401, 0.0
    %vm434 = vcmp.gt.f32.partialorder %v402, 0.0
    %vm435 = vcmp.gt.f32.partialorder %v403, 0.0
    %vm436 = vcmp.gt.f32.partialorder %v404, 0.0
    %vm437 = vcmp.gt.f32.partialorder %v405, 0.0
    %vm438 = vcmp.gt.f32.partialorder %v406, 0.0
    %vm439 = vcmp.gt.f32.partialorder %v407, 0.0
    %vm440 = vcmp.gt.f32.partialorder %v408, 0.0
    %vm441 = vcmp.gt.f32.partialorder %v409, 0.0
    %vm442 = vcmp.gt.f32.partialorder %v410, 0.0
    %vm443 = vcmp.gt.f32.partialorder %v411, 0.0
    %vm444 = vcmp.gt.f32.partialorder %v412, 0.0
    %v445 = vmul.f32 %v381, 0.2
    %v446 = vmul.f32 %v382, 0.2
    %v447 = vmul.f32 %v383, 0.2
    %v448 = vmul.f32 %v384, 0.2
    %v449 = vmul.f32 %v385, 0.2
    %v450 = vmul.f32 %v386, 0.2
    %v451 = vmul.f32 %v387, 0.2
    %v452 = vmul.f32 %v388, 0.2
    %v453 = vmul.f32 %v389, 0.2
    %v454 = vmul.f32 %v390, 0.2
    %v455 = vmul.f32 %v391, 0.2
    %v456 = vmul.f32 %v392, 0.2
    %v457 = vmul.f32 %v393, 0.2
    %v458 = vmul.f32 %v394, 0.2
    %v459 = vmul.f32 %v395, 0.2
    %v460 = vmul.f32 %v396, 0.2
    %v461 = vmul.f32 %v397, 0.2
    %v462 = vmul.f32 %v398, 0.2
    %v463 = vmul.f32 %v399, 0.2
    %v464 = vmul.f32 %v400, 0.2
    %v465 = vmul.f32 %v401, 0.2
    %v466 = vmul.f32 %v402, 0.2
    %v467 = vmul.f32 %v403, 0.2
    %v468 = vmul.f32 %v404, 0.2
    %v469 = vmul.f32 %v405, 0.2
    %v470 = vmul.f32 %v406, 0.2
    %v471 = vmul.f32 %v407, 0.2
    %v472 = vmul.f32 %v408, 0.2
    %v473 = vmul.f32 %v409, 0.2
    %v474 = vmul.f32 %v410, 0.2
    %v475 = vmul.f32 %v411, 0.2
    %v476 = vmul.f32 %v412, 0.2
    %v477 = vsel %vm413, %v381, %v445
    %v478 = vsel %vm414, %v382, %v446
    %v479 = vsel %vm415, %v383, %v447
    %v480 = vsel %vm416, %v384, %v448
    %v481 = vsel %vm417, %v385, %v449
    %v482 = vsel %vm418, %v386, %v450
    %v483 = vsel %vm419, %v387, %v451
    %v484 = vsel %vm420, %v388, %v452
    %v485 = vsel %vm421, %v389, %v453
    %v486 = vsel %vm422, %v390, %v454
    %v487 = vsel %vm423, %v391, %v455
    %v488 = vsel %vm424, %v392, %v456
    %v489 = vsel %vm425, %v393, %v457
    %v490 = vsel %vm426, %v394, %v458
    %v491 = vsel %vm427, %v395, %v459
    %v492 = vsel %vm428, %v396, %v460
    %v493 = vsel %vm429, %v397, %v461
    %v494 = vsel %vm430, %v398, %v462
    %v495 = vsel %vm431, %v399, %v463
    %v496 = vsel %vm432, %v400, %v464
    %v497 = vsel %vm433, %v401, %v465
    %v498 = vsel %vm434, %v402, %v466
    %v499 = vsel %vm435, %v403, %v467
    %v500 = vsel %vm436, %v404, %v468
    %v501 = vsel %vm437, %v405, %v469
    %v502 = vsel %vm438, %v406, %v470
    %v503 = vsel %vm439, %v407, %v471
    %v504 = vsel %vm440, %v408, %v472
    %v505 = vsel %vm441, %v409, %v473
    %v506 = vsel %vm442, %v410, %v474
    %v507 = vsel %vm443, %v411, %v475
    %v508 = vsel %vm444, %v412, %v476
    %v510 = vlaneseq
    %v511 = vshrl.u32 %v510, 7
    %v512 = vsub.s32 0, %v511
    %v513 = vrot.slane %v91, %v512
    %v515 = vmul.f32 %v513, %v477
    %v516 = vmul.f32 %v513, %v478
    %v517 = vmul.f32 %v513, %v479
    %v518 = vmul.f32 %v513, %v480
    %v519 = vmul.f32 %v513, %v481
    %v520 = vmul.f32 %v513, %v482
    %v521 = vmul.f32 %v513, %v483
    %v522 = vmul.f32 %v513, %v484
    %v523 = vmul.f32 %v513, %v485
    %v524 = vmul.f32 %v513, %v486
    %v525 = vmul.f32 %v513, %v487
    %v526 = vmul.f32 %v513, %v488
    %v527 = vmul.f32 %v513, %v489
    %v528 = vmul.f32 %v513, %v490
    %v529 = vmul.f32 %v513, %v491
    %v530 = vmul.f32 %v513, %v492
    %v531 = vmul.f32 %v513, %v493
    %v532 = vmul.f32 %v513, %v494
    %v533 = vmul.f32 %v513, %v495
    %v534 = vmul.f32 %v513, %v496
    %v535 = vmul.f32 %v513, %v497
    %v536 = vmul.f32 %v513, %v498
    %v537 = vmul.f32 %v513, %v499
    %v538 = vmul.f32 %v513, %v500
    %v539 = vmul.f32 %v513, %v501
    %v540 = vmul.f32 %v513, %v502
    %v541 = vmul.f32 %v513, %v503
    %v542 = vmul.f32 %v513, %v504
    %v543 = vmul.f32 %v513, %v505
    %v544 = vmul.f32 %v513, %v506
    %v545 = vmul.f32 %v513, %v507
    %v546 = vmul.f32 %v513, %v508
    %547 = vadd.xlane.f32.xlu0 %v515
    %v548 = vpop.xlane.xlu0 %547
    %549 = vadd.xlane.f32.xlu0 %v516
    %v550 = vpop.xlane.xlu0 %549
    %551 = vadd.xlane.f32.xlu0 %v517
    %v552 = vpop.xlane.xlu0 %551
    %553 = vadd.xlane.f32.xlu0 %v518
    %v554 = vpop.xlane.xlu0 %553
    %555 = vadd.xlane.f32.xlu0 %v519
    %v556 = vpop.xlane.xlu0 %555
    %557 = vadd.xlane.f32.xlu0 %v520
    %v558 = vpop.xlane.xlu0 %557
    %559 = vadd.xlane.f32.xlu0 %v521
    %v560 = vpop.xlane.xlu0 %559
    %561 = vadd.xlane.f32.xlu0 %v522
    %v562 = vpop.xlane.xlu0 %561
    %563 = vadd.xlane.f32.xlu0 %v523
    %v564 = vpop.xlane.xlu0 %563
    %565 = vadd.xlane.f32.xlu0 %v524
    %v566 = vpop.xlane.xlu0 %565
    %567 = vadd.xlane.f32.xlu0 %v525
    %v568 = vpop.xlane.xlu0 %567
    %569 = vadd.xlane.f32.xlu0 %v526
    %v570 = vpop.xlane.xlu0 %569
    %571 = vadd.xlane.f32.xlu0 %v527
    %v572 = vpop.xlane.xlu0 %571
    %573 = vadd.xlane.f32.xlu0 %v528
    %v574 = vpop.xlane.xlu0 %573
    %575 = vadd.xlane.f32.xlu0 %v529
    %v576 = vpop.xlane.xlu0 %575
    %577 = vadd.xlane.f32.xlu0 %v530
    %v578 = vpop.xlane.xlu0 %577
    %579 = vadd.xlane.f32.xlu0 %v531
    %v580 = vpop.xlane.xlu0 %579
    %581 = vadd.xlane.f32.xlu0 %v532
    %v582 = vpop.xlane.xlu0 %581
    %583 = vadd.xlane.f32.xlu0 %v533
    %v584 = vpop.xlane.xlu0 %583
    %585 = vadd.xlane.f32.xlu0 %v534
    %v586 = vpop.xlane.xlu0 %585
    %587 = vadd.xlane.f32.xlu0 %v535
    %v588 = vpop.xlane.xlu0 %587
    %589 = vadd.xlane.f32.xlu0 %v536
    %v590 = vpop.xlane.xlu0 %589
    %591 = vadd.xlane.f32.xlu0 %v537
    %v592 = vpop.xlane.xlu0 %591
    %593 = vadd.xlane.f32.xlu0 %v538
    %v594 = vpop.xlane.xlu0 %593
    %595 = vadd.xlane.f32.xlu0 %v539
    %v596 = vpop.xlane.xlu0 %595
    %597 = vadd.xlane.f32.xlu0 %v540
    %v598 = vpop.xlane.xlu0 %597
    %599 = vadd.xlane.f32.xlu0 %v541
    %v600 = vpop.xlane.xlu0 %599
    %601 = vadd.xlane.f32.xlu0 %v542
    %v602 = vpop.xlane.xlu0 %601
    %603 = vadd.xlane.f32.xlu0 %v543
    %v604 = vpop.xlane.xlu0 %603
    %605 = vadd.xlane.f32.xlu0 %v544
    %v606 = vpop.xlane.xlu0 %605
    %607 = vadd.xlane.f32.xlu0 %v545
    %v608 = vpop.xlane.xlu0 %607
    %609 = vadd.xlane.f32.xlu0 %v546
    %v610 = vpop.xlane.xlu0 %609
    %v643 = vlaneseq
    %v644 = vand.u32 %v643, 127
    %v645 = vlaneseq
    %v646 = vshrl.u32 %v645, 7
    %v647 = vsub.s32 %v644, %v646
    %v648 = vrot.slane %v548, %v647
    %v649 = vadd.s32 %v644, 4294967288
    %v650 = vlaneseq
    %v651 = vshrl.u32 %v650, 7
    %v652 = vsub.s32 %v649, %v651
    %v653 = vrot.slane %v550, %v652
    %vm654 = vcmask 130112
    %v655 = vsel %vm654, %v653, %v648
    %v656 = vlaneseq
    %v657 = vshrl.u32 %v656, 7
    %v658 = vsub.s32 %v644, %v657
    %v659 = vrot.slane %v552, %v658
    %v660 = vlaneseq
    %v661 = vshrl.u32 %v660, 7
    %v662 = vsub.s32 %v649, %v661
    %v663 = vrot.slane %v554, %v662
    %v664 = vsel %vm654, %v663, %v659
    %v665 = vlaneseq
    %v666 = vshrl.u32 %v665, 7
    %v667 = vsub.s32 %v644, %v666
    %v668 = vrot.slane %v556, %v667
    %v669 = vlaneseq
    %v670 = vshrl.u32 %v669, 7
    %v671 = vsub.s32 %v649, %v670
    %v672 = vrot.slane %v558, %v671
    %v673 = vsel %vm654, %v672, %v668
    %v674 = vlaneseq
    %v675 = vshrl.u32 %v674, 7
    %v676 = vsub.s32 %v644, %v675
    %v677 = vrot.slane %v560, %v676
    %v678 = vlaneseq
    %v679 = vshrl.u32 %v678, 7
    %v680 = vsub.s32 %v649, %v679
    %v681 = vrot.slane %v562, %v680
    %v682 = vsel %vm654, %v681, %v677
    %v683 = vlaneseq
    %v684 = vshrl.u32 %v683, 7
    %v685 = vsub.s32 %v644, %v684
    %v686 = vrot.slane %v564, %v685
    %v687 = vlaneseq
    %v688 = vshrl.u32 %v687, 7
    %v689 = vsub.s32 %v649, %v688
    %v690 = vrot.slane %v566, %v689
    %v691 = vsel %vm654, %v690, %v686
    %v692 = vlaneseq
    %v693 = vshrl.u32 %v692, 7
    %v694 = vsub.s32 %v644, %v693
    %v695 = vrot.slane %v568, %v694
    %v696 = vlaneseq
    %v697 = vshrl.u32 %v696, 7
    %v698 = vsub.s32 %v649, %v697
    %v699 = vrot.slane %v570, %v698
    %v700 = vsel %vm654, %v699, %v695
    %v701 = vlaneseq
    %v702 = vshrl.u32 %v701, 7
    %v703 = vsub.s32 %v644, %v702
    %v704 = vrot.slane %v572, %v703
    %v705 = vlaneseq
    %v706 = vshrl.u32 %v705, 7
    %v707 = vsub.s32 %v649, %v706
    %v708 = vrot.slane %v574, %v707
    %v709 = vsel %vm654, %v708, %v704
    %v710 = vlaneseq
    %v711 = vshrl.u32 %v710, 7
    %v712 = vsub.s32 %v644, %v711
    %v713 = vrot.slane %v576, %v712
    %v714 = vlaneseq
    %v715 = vshrl.u32 %v714, 7
    %v716 = vsub.s32 %v649, %v715
    %v717 = vrot.slane %v578, %v716
    %v718 = vsel %vm654, %v717, %v713
    %v719 = vlaneseq
    %v720 = vshrl.u32 %v719, 7
    %v721 = vsub.s32 %v644, %v720
    %v722 = vrot.slane %v580, %v721
    %v723 = vlaneseq
    %v724 = vshrl.u32 %v723, 7
    %v725 = vsub.s32 %v649, %v724
    %v726 = vrot.slane %v582, %v725
    %v727 = vsel %vm654, %v726, %v722
    %v728 = vlaneseq
    %v729 = vshrl.u32 %v728, 7
    %v730 = vsub.s32 %v644, %v729
    %v731 = vrot.slane %v584, %v730
    %v732 = vlaneseq
    %v733 = vshrl.u32 %v732, 7
    %v734 = vsub.s32 %v649, %v733
    %v735 = vrot.slane %v586, %v734
    %v736 = vsel %vm654, %v735, %v731
    %v737 = vlaneseq
    %v738 = vshrl.u32 %v737, 7
    %v739 = vsub.s32 %v644, %v738
    %v740 = vrot.slane %v588, %v739
    %v741 = vlaneseq
    %v742 = vshrl.u32 %v741, 7
    %v743 = vsub.s32 %v649, %v742
    %v744 = vrot.slane %v590, %v743
    %v745 = vsel %vm654, %v744, %v740
    %v746 = vlaneseq
    %v747 = vshrl.u32 %v746, 7
    %v748 = vsub.s32 %v644, %v747
    %v749 = vrot.slane %v592, %v748
    %v750 = vlaneseq
    %v751 = vshrl.u32 %v750, 7
    %v752 = vsub.s32 %v649, %v751
    %v753 = vrot.slane %v594, %v752
    %v754 = vsel %vm654, %v753, %v749
    %v755 = vlaneseq
    %v756 = vshrl.u32 %v755, 7
    %v757 = vsub.s32 %v644, %v756
    %v758 = vrot.slane %v596, %v757
    %v759 = vlaneseq
    %v760 = vshrl.u32 %v759, 7
    %v761 = vsub.s32 %v649, %v760
    %v762 = vrot.slane %v598, %v761
    %v763 = vsel %vm654, %v762, %v758
    %v764 = vlaneseq
    %v765 = vshrl.u32 %v764, 7
    %v766 = vsub.s32 %v644, %v765
    %v767 = vrot.slane %v600, %v766
    %v768 = vlaneseq
    %v769 = vshrl.u32 %v768, 7
    %v770 = vsub.s32 %v649, %v769
    %v771 = vrot.slane %v602, %v770
    %v772 = vsel %vm654, %v771, %v767
    %v773 = vlaneseq
    %v774 = vshrl.u32 %v773, 7
    %v775 = vsub.s32 %v644, %v774
    %v776 = vrot.slane %v604, %v775
    %v777 = vlaneseq
    %v778 = vshrl.u32 %v777, 7
    %v779 = vsub.s32 %v649, %v778
    %v780 = vrot.slane %v606, %v779
    %v781 = vsel %vm654, %v780, %v776
    %v782 = vlaneseq
    %v783 = vshrl.u32 %v782, 7
    %v784 = vsub.s32 %v644, %v783
    %v785 = vrot.slane %v608, %v784
    %v786 = vlaneseq
    %v787 = vshrl.u32 %v786, 7
    %v788 = vsub.s32 %v649, %v787
    %v789 = vrot.slane %v610, %v788
    %v790 = vsel %vm654, %v789, %v785
    %vm791 = vcmask 1041409
    %v792 = vsel %vm791, %v664, %v655
    %vm793 = vcmask 1042434
    %v794 = vsel %vm793, %v673, %v792
    %vm795 = vcmask 1043459
    %v796 = vsel %vm795, %v682, %v794
    %vm797 = vcmask 1044484
    %v798 = vsel %vm797, %v691, %v796
    %vm799 = vcmask 1045509
    %v800 = vsel %vm799, %v700, %v798
    %vm801 = vcmask 1046534
    %v802 = vsel %vm801, %v709, %v800
    %vm803 = vcmask 1047559
    %v804 = vsel %vm803, %v718, %v802
    %v805 = vsel %vm791, %v736, %v727
    %v806 = vsel %vm793, %v745, %v805
    %v807 = vsel %vm795, %v754, %v806
    %v808 = vsel %vm797, %v763, %v807
    %v809 = vsel %vm799, %v772, %v808
    %v810 = vsel %vm801, %v781, %v809
    %v811 = vsel %vm803, %v790, %v810
    %v814 = vsel %vm87, %v804, -1e+30
    %v815 = vsel %vm88, %v811, -1e+30
    %vm816 = vcmask 130048
    %v817 = vsel %vm816, %v814, -inf
    %818 = vmax.xlane.f32.xlu0 %v817
    %v819 = vpop.xlane.xlu0 %818
    %v820 = vsel %vm816, %v815, -inf
    %821 = vmax.xlane.f32.xlu0 %v820
    %v822 = vpop.xlane.xlu0 %821
    %v823 = vsub.f32 %v814, %v819
    %v824 = vsub.f32 %v815, %v822
    %v825 = vmul.f32 %v823, 1.442695
    %v826 = vpow.pop %v825
    %v827 = vmul.f32 %v824, 1.442695
    %v828 = vpow.pop %v827
    %v829 = vsel %vm816, %v826, 0.0
    %830 = vadd.xlane.f32.xlu0 %v829
    %v831 = vpop.xlane.xlu0 %830
    %v832 = vsel %vm816, %v828, 0.0
    %833 = vadd.xlane.f32.xlu0 %v832
    %v834 = vpop.xlane.xlu0 %833
    %v836 = vsel %vm816, %v826, 0
    %v839 = vsel %vm816, %v828, 0
    %841 = vmatprep.subr.mxu0 0.0
    %842 = vmatpush1.msra.mxu0 %v191
    %843 = vmatprep.subr.mxu0 0.0
    %844 = vmatpush1.msra.mxu0 %v197
    %845 = vmatprep.subr.mxu0 0.0
    %846 = vmatpush1.msra.mxu0 0.0
    %847 = vmatprep.subr.mxu0 0.0
    %848 = vmatpush1.msra.mxu0 0.0
    %849 = vmatprep.subr.mxu0 0.0
    %850 = vmatpush1.msra.mxu0 0.0
    %851 = vmatprep.subr.mxu0 0.0
    %852 = vmatpush1.msra.mxu0 0.0
    %853 = vmatprep.subr.mxu0 0.0
    %854 = vmatpush1.msra.mxu0 0.0
    %855 = vmatprep.subr.mxu0 0.0
    %856 = vmatpush1.msra.mxu0 0.0
    %857 = vmatprep.subr.mxu0 0.0
    %858 = vmatpush1.msra.mxu0 0.0
    %859 = vmatprep.subr.mxu0 0.0
    %860 = vmatpush1.msra.mxu0 0.0
    %861 = vmatprep.subr.mxu0 0.0
    %862 = vmatpush1.msra.mxu0 0.0
    %863 = vmatprep.subr.mxu0 0.0
    %864 = vmatpush1.msra.mxu0 0.0
    %865 = vmatprep.subr.mxu0 0.0
    %866 = vmatpush1.msra.mxu0 0.0
    %867 = vmatprep.subr.mxu0 0.0
    %868 = vmatpush1.msra.mxu0 0.0
    %869 = vmatprep.subr.mxu0 0.0
    %870 = vmatpush1.msra.mxu0 0.0
    %871 = vmatprep.subr.mxu0 0.0
    %872 = vmatpush1.msra.mxu0 0.0
    %873 = vmatprep.subr.mxu0 0.0
    %874 = vmatpush1.msra.mxu0 0.0
    %875 = vmatprep.subr.mxu0 0.0
    %876 = vmatpush1.msra.mxu0 0.0
    %877 = vmatprep.subr.mxu0 0.0
    %878 = vmatpush1.msra.mxu0 0.0
    %879 = vmatprep.subr.mxu0 0.0
    %880 = vmatpush1.msra.mxu0 0.0
    %881 = vmatprep.subr.mxu0 0.0
    %882 = vmatpush1.msra.mxu0 0.0
    %883 = vmatprep.subr.mxu0 0.0
    %884 = vmatpush1.msra.mxu0 0.0
    %885 = vmatprep.subr.mxu0 0.0
    %886 = vmatpush1.msra.mxu0 0.0
    %887 = vmatprep.subr.mxu0 0.0
    %888 = vmatpush1.msra.mxu0 0.0
    %889 = vmatprep.subr.mxu0 0.0
    %890 = vmatpush1.msra.mxu0 0.0
    %891 = vmatprep.subr.mxu0 0.0
    %892 = vmatpush1.msra.mxu0 0.0
    %893 = vmatprep.subr.mxu0 0.0
    %894 = vmatpush1.msra.mxu0 0.0
    %895 = vmatprep.subr.mxu0 0.0
    %896 = vmatpush1.msra.mxu0 0.0
    %897 = vmatprep.subr.mxu0 0.0
    %898 = vmatpush1.msra.mxu0 0.0
    %899 = vmatprep.subr.mxu0 0.0
    %900 = vmatpush1.msra.mxu0 0.0
    %901 = vmatprep.subr.mxu0 0.0
    %902 = vmatpush1.msra.mxu0 0.0
    %903 = vmatprep.subr.mxu0 0.0
    %904 = vmatpush1.msra.mxu0 0.0
    %905 = vmatprep.mubr.f32.mxu0 0.0
    %906 = vmatmul.mubr.f32.gmra.mrb[0].mxu0 %v836
    %v907 = vpop.f32.mrb[0].mxu0
    %v908 = vadd.f32 0.0, %v907
    %v909 = vpop.f32.mrb[0].mxu0
    %910 = vmatprep.mubr.f32.mxu0 0.0
    %911 = vmatmul.mubr.f32.gmra.mrb[0].mxu0 %v839
    %v912 = vpop.f32.mrb[0].mxu0
    %v913 = vadd.f32 0.0, %v912
    %v914 = vpop.f32.mrb[0].mxu0
    %915 = vdwg.mxu0
    %v916 = vmax.f32 %v831, 1e-30
    %v917 = vmax.f32 %v834, 1e-30
    %v918 = vrcp.pop %v916
    %v919 = vrcp.pop %v917
    %v920 = vmul.f32 %v908, %v918
    %v921 = vmul.f32 %v913, %v919
    %v922 = vld [vmem:[%s4] sm:$0x1]
    %v924 = vlaneseq
    %v925 = vshrl.u32 %v924, 7
    %v926 = vsub.s32 0, %v925
    %v927 = vrot.slane %v922, %v926
    %v929 = vadd.f32 %v920, %v927
    %v930 = vadd.f32 %v921, %v927
    %vm931 = vcmp.gt.f32.partialorder %v929, 0.0
    %vm932 = vcmp.gt.f32.partialorder %v930, 0.0
    %v933 = vmul.f32 %v929, 1.442695
    %v934 = vpow.pop %v933
    %v935 = vmul.f32 %v930, 1.442695
    %v936 = vpow.pop %v935
    %v937 = vsub.f32 %v934, 1.0
    %v938 = vsub.f32 %v936, 1.0
    %v939 = vsel %vm931, %v929, %v937
    %v940 = vsel %vm932, %v930, %v938
    %v941 = vld [vmem:[%s6] sm:$0x1]
    %v942 = vld [vmem:[#allocation8] sm:$0xff]
    %v943 = vld [vmem:[#allocation8 + $0x8] sm:$0xff]
    %v944 = vld [vmem:[#allocation8 + $0x10] sm:$0xff]
    %v945 = vld [vmem:[#allocation8 + $0x18] sm:$0xff]
    %v946 = vld [vmem:[#allocation8 + $0x20] sm:$0xff]
    %v947 = vld [vmem:[#allocation8 + $0x28] sm:$0xff]
    %v948 = vld [vmem:[#allocation8 + $0x30] sm:$0xff]
    %v949 = vld [vmem:[#allocation8 + $0x38] sm:$0xff]
    %v950 = vld [vmem:[#allocation8 + $0x40] sm:$0xff]
    %v951 = vld [vmem:[#allocation8 + $0x48] sm:$0xff]
    %v952 = vld [vmem:[#allocation8 + $0x50] sm:$0xff]
    %v953 = vld [vmem:[#allocation8 + $0x58] sm:$0xff]
    %v954 = vld [vmem:[#allocation8 + $0x60] sm:$0xff]
    %v955 = vld [vmem:[#allocation8 + $0x68] sm:$0xff]
    %v956 = vld [vmem:[#allocation8 + $0x70] sm:$0xff]
    %v957 = vld [vmem:[#allocation8 + $0x78] sm:$0xff]
    %v958 = vld [vmem:[#allocation8 + $0x80] sm:$0xff]
    %v959 = vld [vmem:[#allocation8 + $0x88] sm:$0xff]
    %v960 = vld [vmem:[#allocation8 + $0x90] sm:$0xff]
    %v961 = vld [vmem:[#allocation8 + $0x98] sm:$0xff]
    %v962 = vld [vmem:[#allocation8 + $0xa0] sm:$0xff]
    %v963 = vld [vmem:[#allocation8 + $0xa8] sm:$0xff]
    %v964 = vld [vmem:[#allocation8 + $0xb0] sm:$0xff]
    %v965 = vld [vmem:[#allocation8 + $0xb8] sm:$0xff]
    %v966 = vld [vmem:[#allocation8 + $0xc0] sm:$0xff]
    %v967 = vld [vmem:[#allocation8 + $0xc8] sm:$0xff]
    %v968 = vld [vmem:[#allocation8 + $0xd0] sm:$0xff]
    %v969 = vld [vmem:[#allocation8 + $0xd8] sm:$0xff]
    %v970 = vld [vmem:[#allocation8 + $0xe0] sm:$0xff]
    %v971 = vld [vmem:[#allocation8 + $0xe8] sm:$0xff]
    %v972 = vld [vmem:[#allocation8 + $0xf0] sm:$0xff]
    %v973 = vld [vmem:[#allocation8 + $0xf8] sm:$0xff]
    %974 = vmatprep.subr.mxu0 %v943
    %975 = vmatpush1.msra.mxu0 %v942
    %976 = vmatprep.subr.mxu0 %v945
    %977 = vmatpush1.msra.mxu0 %v944
    %978 = vmatprep.subr.mxu0 %v947
    %979 = vmatpush1.msra.mxu0 %v946
    %980 = vmatprep.subr.mxu0 %v949
    %981 = vmatpush1.msra.mxu0 %v948
    %982 = vmatprep.subr.mxu0 %v951
    %983 = vmatpush1.msra.mxu0 %v950
    %984 = vmatprep.subr.mxu0 %v953
    %985 = vmatpush1.msra.mxu0 %v952
    %986 = vmatprep.subr.mxu0 %v955
    %987 = vmatpush1.msra.mxu0 %v954
    %988 = vmatprep.subr.mxu0 %v957
    %989 = vmatpush1.msra.mxu0 %v956
    %990 = vmatprep.subr.mxu0 %v959
    %991 = vmatpush1.msra.mxu0 %v958
    %992 = vmatprep.subr.mxu0 %v961
    %993 = vmatpush1.msra.mxu0 %v960
    %994 = vmatprep.subr.mxu0 %v963
    %995 = vmatpush1.msra.mxu0 %v962
    %996 = vmatprep.subr.mxu0 %v965
    %997 = vmatpush1.msra.mxu0 %v964
    %998 = vmatprep.subr.mxu0 %v967
    %999 = vmatpush1.msra.mxu0 %v966
    %1000 = vmatprep.subr.mxu0 %v969
    %1001 = vmatpush1.msra.mxu0 %v968
    %1002 = vmatprep.subr.mxu0 %v971
    %1003 = vmatpush1.msra.mxu0 %v970
    %1004 = vmatprep.subr.mxu0 %v973
    %1005 = vmatpush1.msra.mxu0 %v972
    %1006 = vmatprep.subr.mxu0 0.0
    %1007 = vmatpush1.msra.mxu0 0.0
    %1008 = vmatprep.subr.mxu0 0.0
    %1009 = vmatpush1.msra.mxu0 0.0
    %1010 = vmatprep.subr.mxu0 0.0
    %1011 = vmatpush1.msra.mxu0 0.0
    %1012 = vmatprep.subr.mxu0 0.0
    %1013 = vmatpush1.msra.mxu0 0.0
    %1014 = vmatprep.subr.mxu0 0.0
    %1015 = vmatpush1.msra.mxu0 0.0
    %1016 = vmatprep.subr.mxu0 0.0
    %1017 = vmatpush1.msra.mxu0 0.0
    %1018 = vmatprep.subr.mxu0 0.0
    %1019 = vmatpush1.msra.mxu0 0.0
    %1020 = vmatprep.subr.mxu0 0.0
    %1021 = vmatpush1.msra.mxu0 0.0
    %1022 = vmatprep.subr.mxu0 0.0
    %1023 = vmatpush1.msra.mxu0 0.0
    %1024 = vmatprep.subr.mxu0 0.0
    %1025 = vmatpush1.msra.mxu0 0.0
    %1026 = vmatprep.subr.mxu0 0.0
    %1027 = vmatpush1.msra.mxu0 0.0
    %1028 = vmatprep.subr.mxu0 0.0
    %1029 = vmatpush1.msra.mxu0 0.0
    %1030 = vmatprep.subr.mxu0 0.0
    %1031 = vmatpush1.msra.mxu0 0.0
    %1032 = vmatprep.subr.mxu0 0.0
    %1033 = vmatpush1.msra.mxu0 0.0
    %1034 = vmatprep.subr.mxu0 0.0
    %1035 = vmatpush1.msra.mxu0 0.0
    %1036 = vmatprep.subr.mxu0 0.0
    %1037 = vmatpush1.msra.mxu0 0.0
    %1038 = vmatprep.mubr.f32.mxu0 0.0
    %1039 = vmatmul.mubr.f32.gmra.mrb[0].mxu0 %v939
    %v1040 = vpop.f32.mrb[0].mxu0
    %v1041 = vadd.f32 0.0, %v1040
    %v1042 = vpop.f32.mrb[0].mxu0
    %v1043 = vadd.f32 0.0, %v1042
    %1044 = vmatprep.mubr.f32.mxu0 0.0
    %1045 = vmatmul.mubr.f32.gmra.mrb[0].mxu0 %v940
    %v1046 = vpop.f32.mrb[0].mxu0
    %v1047 = vadd.f32 0.0, %v1046
    %v1048 = vpop.f32.mrb[0].mxu0
    %v1049 = vadd.f32 0.0, %v1048
    %1050 = vdwg.mxu0
    %v1053 = vcombine.high %v1043, %v1043
    %v1055 = vunpack.c.l.s4 1966171168
    %v1056 = vunpack.c.0.s8 %v1055
    %v1057 = vlaneseq
    %v1058 = vshrl.u32 %v1057, 7
    %v1059 = vsub.s32 %v1056, %v1058
    %v1060 = vrot.slane %v1043, %v1059
    %v1062 = vunpack.c.l.s4 1966171168
    %v1063 = vunpack.c.0.s8 %v1062
    %v1064 = vlaneseq
    %v1065 = vshrl.u32 %v1064, 7
    %v1066 = vsub.s32 %v1063, %v1065
    %v1067 = vrot.slane %v1053, %v1066
    %v1068 = vcombine.high %v1060, %v1060
    %v1069 = vcombine.high %v1067, %v1067
    %v1071 = vunpack.c.l.s4 1966171168
    %v1072 = vunpack.c.0.s8 %v1071
    %v1073 = vlaneseq
    %v1074 = vshrl.u32 %v1073, 7
    %v1075 = vsub.s32 %v1072, %v1074
    %v1076 = vrot.slane %v1060, %v1075
    %v1078 = vunpack.c.l.s4 1966171168
    %v1079 = vunpack.c.0.s8 %v1078
    %v1080 = vlaneseq
    %v1081 = vshrl.u32 %v1080, 7
    %v1082 = vsub.s32 %v1079, %v1081
    %v1083 = vrot.slane %v1067, %v1082
    %v1085 = vunpack.c.l.s4 1966171168
    %v1086 = vunpack.c.0.s8 %v1085
    %v1087 = vlaneseq
    %v1088 = vshrl.u32 %v1087, 7
    %v1089 = vsub.s32 %v1086, %v1088
    %v1090 = vrot.slane %v1068, %v1089
    %v1092 = vunpack.c.l.s4 1966171168
    %v1093 = vunpack.c.0.s8 %v1092
    %v1094 = vlaneseq
    %v1095 = vshrl.u32 %v1094, 7
    %v1096 = vsub.s32 %v1093, %v1095
    %v1097 = vrot.slane %v1069, %v1096
    %v1098 = vcombine.high %v1076, %v1076
    %v1099 = vcombine.high %v1083, %v1083
    %v1100 = vcombine.high %v1090, %v1090
    %v1101 = vcombine.high %v1097, %v1097
    %v1102 = vcombine.high %v1049, %v1049
    %v1104 = vunpack.c.l.s4 1966171168
    %v1105 = vunpack.c.0.s8 %v1104
    %v1106 = vlaneseq
    %v1107 = vshrl.u32 %v1106, 7
    %v1108 = vsub.s32 %v1105, %v1107
    %v1109 = vrot.slane %v1049, %v1108
    %v1111 = vunpack.c.l.s4 1966171168
    %v1112 = vunpack.c.0.s8 %v1111
    %v1113 = vlaneseq
    %v1114 = vshrl.u32 %v1113, 7
    %v1115 = vsub.s32 %v1112, %v1114
    %v1116 = vrot.slane %v1102, %v1115
    %v1117 = vcombine.high %v1109, %v1109
    %v1118 = vcombine.high %v1116, %v1116
    %v1120 = vunpack.c.l.s4 1966171168
    %v1121 = vunpack.c.0.s8 %v1120
    %v1122 = vlaneseq
    %v1123 = vshrl.u32 %v1122, 7
    %v1124 = vsub.s32 %v1121, %v1123
    %v1125 = vrot.slane %v1109, %v1124
    %v1127 = vunpack.c.l.s4 1966171168
    %v1128 = vunpack.c.0.s8 %v1127
    %v1129 = vlaneseq
    %v1130 = vshrl.u32 %v1129, 7
    %v1131 = vsub.s32 %v1128, %v1130
    %v1132 = vrot.slane %v1116, %v1131
    %v1134 = vunpack.c.l.s4 1966171168
    %v1135 = vunpack.c.0.s8 %v1134
    %v1136 = vlaneseq
    %v1137 = vshrl.u32 %v1136, 7
    %v1138 = vsub.s32 %v1135, %v1137
    %v1139 = vrot.slane %v1117, %v1138
    %v1141 = vunpack.c.l.s4 1966171168
    %v1142 = vunpack.c.0.s8 %v1141
    %v1143 = vlaneseq
    %v1144 = vshrl.u32 %v1143, 7
    %v1145 = vsub.s32 %v1142, %v1144
    %v1146 = vrot.slane %v1118, %v1145
    %v1147 = vcombine.high %v1125, %v1125
    %v1148 = vcombine.high %v1132, %v1132
    %v1149 = vcombine.high %v1139, %v1139
    %v1150 = vcombine.high %v1146, %v1146
    %v1151 = vlaneseq
    %v1152 = vshrl.u32 %v1151, 7
    %v1153 = vsub.s32 0, %v1152
    %v1154 = vrot.slane %v1076, %v1153
    %v1155 = vlaneseq
    %v1156 = vshrl.u32 %v1155, 7
    %v1157 = vsub.s32 0, %v1156
    %v1158 = vrot.slane %v1090, %v1157
    %v1159 = vlaneseq
    %v1160 = vshrl.u32 %v1159, 7
    %v1161 = vsub.s32 0, %v1160
    %v1162 = vrot.slane %v1098, %v1161
    %v1163 = vlaneseq
    %v1164 = vshrl.u32 %v1163, 7
    %v1165 = vsub.s32 0, %v1164
    %v1166 = vrot.slane %v1100, %v1165
    %v1167 = vlaneseq
    %v1168 = vshrl.u32 %v1167, 7
    %v1169 = vsub.s32 0, %v1168
    %v1170 = vrot.slane %v1083, %v1169
    %v1171 = vlaneseq
    %v1172 = vshrl.u32 %v1171, 7
    %v1173 = vsub.s32 0, %v1172
    %v1174 = vrot.slane %v1097, %v1173
    %v1175 = vlaneseq
    %v1176 = vshrl.u32 %v1175, 7
    %v1177 = vsub.s32 0, %v1176
    %v1178 = vrot.slane %v1099, %v1177
    %v1179 = vlaneseq
    %v1180 = vshrl.u32 %v1179, 7
    %v1181 = vsub.s32 0, %v1180
    %v1182 = vrot.slane %v1101, %v1181
    %v1183 = vlaneseq
    %v1184 = vshrl.u32 %v1183, 7
    %v1185 = vsub.s32 0, %v1184
    %v1186 = vrot.slane %v1125, %v1185
    %v1187 = vlaneseq
    %v1188 = vshrl.u32 %v1187, 7
    %v1189 = vsub.s32 0, %v1188
    %v1190 = vrot.slane %v1139, %v1189
    %v1191 = vlaneseq
    %v1192 = vshrl.u32 %v1191, 7
    %v1193 = vsub.s32 0, %v1192
    %v1194 = vrot.slane %v1147, %v1193
    %v1195 = vlaneseq
    %v1196 = vshrl.u32 %v1195, 7
    %v1197 = vsub.s32 0, %v1196
    %v1198 = vrot.slane %v1149, %v1197
    %v1199 = vlaneseq
    %v1200 = vshrl.u32 %v1199, 7
    %v1201 = vsub.s32 0, %v1200
    %v1202 = vrot.slane %v1132, %v1201
    %v1203 = vlaneseq
    %v1204 = vshrl.u32 %v1203, 7
    %v1205 = vsub.s32 0, %v1204
    %v1206 = vrot.slane %v1146, %v1205
    %v1207 = vlaneseq
    %v1208 = vshrl.u32 %v1207, 7
    %v1209 = vsub.s32 0, %v1208
    %v1210 = vrot.slane %v1148, %v1209
    %v1211 = vlaneseq
    %v1212 = vshrl.u32 %v1211, 7
    %v1213 = vsub.s32 0, %v1212
    %v1214 = vrot.slane %v1150, %v1213
    %v1231 = vadd.f32 %v1041, %v1154
    %v1232 = vadd.f32 %v1047, %v1154
    %v1233 = vadd.f32 %v1041, %v1158
    %v1234 = vadd.f32 %v1047, %v1158
    %v1235 = vadd.f32 %v1041, %v1162
    %v1236 = vadd.f32 %v1047, %v1162
    %v1237 = vadd.f32 %v1041, %v1166
    %v1238 = vadd.f32 %v1047, %v1166
    %v1239 = vadd.f32 %v1041, %v1170
    %v1240 = vadd.f32 %v1047, %v1170
    %v1241 = vadd.f32 %v1041, %v1174
    %v1242 = vadd.f32 %v1047, %v1174
    %v1243 = vadd.f32 %v1041, %v1178
    %v1244 = vadd.f32 %v1047, %v1178
    %v1245 = vadd.f32 %v1041, %v1182
    %v1246 = vadd.f32 %v1047, %v1182
    %v1247 = vadd.f32 %v1041, %v1186
    %v1248 = vadd.f32 %v1047, %v1186
    %v1249 = vadd.f32 %v1041, %v1190
    %v1250 = vadd.f32 %v1047, %v1190
    %v1251 = vadd.f32 %v1041, %v1194
    %v1252 = vadd.f32 %v1047, %v1194
    %v1253 = vadd.f32 %v1041, %v1198
    %v1254 = vadd.f32 %v1047, %v1198
    %v1255 = vadd.f32 %v1041, %v1202
    %v1256 = vadd.f32 %v1047, %v1202
    %v1257 = vadd.f32 %v1041, %v1206
    %v1258 = vadd.f32 %v1047, %v1206
    %v1259 = vadd.f32 %v1041, %v1210
    %v1260 = vadd.f32 %v1047, %v1210
    %v1261 = vadd.f32 %v1041, %v1214
    %v1262 = vadd.f32 %v1047, %v1214
    %vm1263 = vcmp.gt.f32.partialorder %v1231, 0.0
    %vm1264 = vcmp.gt.f32.partialorder %v1232, 0.0
    %vm1265 = vcmp.gt.f32.partialorder %v1233, 0.0
    %vm1266 = vcmp.gt.f32.partialorder %v1234, 0.0
    %vm1267 = vcmp.gt.f32.partialorder %v1235, 0.0
    %vm1268 = vcmp.gt.f32.partialorder %v1236, 0.0
    %vm1269 = vcmp.gt.f32.partialorder %v1237, 0.0
    %vm1270 = vcmp.gt.f32.partialorder %v1238, 0.0
    %vm1271 = vcmp.gt.f32.partialorder %v1239, 0.0
    %vm1272 = vcmp.gt.f32.partialorder %v1240, 0.0
    %vm1273 = vcmp.gt.f32.partialorder %v1241, 0.0
    %vm1274 = vcmp.gt.f32.partialorder %v1242, 0.0
    %vm1275 = vcmp.gt.f32.partialorder %v1243, 0.0
    %vm1276 = vcmp.gt.f32.partialorder %v1244, 0.0
    %vm1277 = vcmp.gt.f32.partialorder %v1245, 0.0
    %vm1278 = vcmp.gt.f32.partialorder %v1246, 0.0
    %vm1279 = vcmp.gt.f32.partialorder %v1247, 0.0
    %vm1280 = vcmp.gt.f32.partialorder %v1248, 0.0
    %vm1281 = vcmp.gt.f32.partialorder %v1249, 0.0
    %vm1282 = vcmp.gt.f32.partialorder %v1250, 0.0
    %vm1283 = vcmp.gt.f32.partialorder %v1251, 0.0
    %vm1284 = vcmp.gt.f32.partialorder %v1252, 0.0
    %vm1285 = vcmp.gt.f32.partialorder %v1253, 0.0
    %vm1286 = vcmp.gt.f32.partialorder %v1254, 0.0
    %vm1287 = vcmp.gt.f32.partialorder %v1255, 0.0
    %vm1288 = vcmp.gt.f32.partialorder %v1256, 0.0
    %vm1289 = vcmp.gt.f32.partialorder %v1257, 0.0
    %vm1290 = vcmp.gt.f32.partialorder %v1258, 0.0
    %vm1291 = vcmp.gt.f32.partialorder %v1259, 0.0
    %vm1292 = vcmp.gt.f32.partialorder %v1260, 0.0
    %vm1293 = vcmp.gt.f32.partialorder %v1261, 0.0
    %vm1294 = vcmp.gt.f32.partialorder %v1262, 0.0
    %v1295 = vmul.f32 %v1231, 0.2
    %v1296 = vmul.f32 %v1232, 0.2
    %v1297 = vmul.f32 %v1233, 0.2
    %v1298 = vmul.f32 %v1234, 0.2
    %v1299 = vmul.f32 %v1235, 0.2
    %v1300 = vmul.f32 %v1236, 0.2
    %v1301 = vmul.f32 %v1237, 0.2
    %v1302 = vmul.f32 %v1238, 0.2
    %v1303 = vmul.f32 %v1239, 0.2
    %v1304 = vmul.f32 %v1240, 0.2
    %v1305 = vmul.f32 %v1241, 0.2
    %v1306 = vmul.f32 %v1242, 0.2
    %v1307 = vmul.f32 %v1243, 0.2
    %v1308 = vmul.f32 %v1244, 0.2
    %v1309 = vmul.f32 %v1245, 0.2
    %v1310 = vmul.f32 %v1246, 0.2
    %v1311 = vmul.f32 %v1247, 0.2
    %v1312 = vmul.f32 %v1248, 0.2
    %v1313 = vmul.f32 %v1249, 0.2
    %v1314 = vmul.f32 %v1250, 0.2
    %v1315 = vmul.f32 %v1251, 0.2
    %v1316 = vmul.f32 %v1252, 0.2
    %v1317 = vmul.f32 %v1253, 0.2
    %v1318 = vmul.f32 %v1254, 0.2
    %v1319 = vmul.f32 %v1255, 0.2
    %v1320 = vmul.f32 %v1256, 0.2
    %v1321 = vmul.f32 %v1257, 0.2
    %v1322 = vmul.f32 %v1258, 0.2
    %v1323 = vmul.f32 %v1259, 0.2
    %v1324 = vmul.f32 %v1260, 0.2
    %v1325 = vmul.f32 %v1261, 0.2
    %v1326 = vmul.f32 %v1262, 0.2
    %v1327 = vsel %vm1263, %v1231, %v1295
    %v1328 = vsel %vm1264, %v1232, %v1296
    %v1329 = vsel %vm1265, %v1233, %v1297
    %v1330 = vsel %vm1266, %v1234, %v1298
    %v1331 = vsel %vm1267, %v1235, %v1299
    %v1332 = vsel %vm1268, %v1236, %v1300
    %v1333 = vsel %vm1269, %v1237, %v1301
    %v1334 = vsel %vm1270, %v1238, %v1302
    %v1335 = vsel %vm1271, %v1239, %v1303
    %v1336 = vsel %vm1272, %v1240, %v1304
    %v1337 = vsel %vm1273, %v1241, %v1305
    %v1338 = vsel %vm1274, %v1242, %v1306
    %v1339 = vsel %vm1275, %v1243, %v1307
    %v1340 = vsel %vm1276, %v1244, %v1308
    %v1341 = vsel %vm1277, %v1245, %v1309
    %v1342 = vsel %vm1278, %v1246, %v1310
    %v1343 = vsel %vm1279, %v1247, %v1311
    %v1344 = vsel %vm1280, %v1248, %v1312
    %v1345 = vsel %vm1281, %v1249, %v1313
    %v1346 = vsel %vm1282, %v1250, %v1314
    %v1347 = vsel %vm1283, %v1251, %v1315
    %v1348 = vsel %vm1284, %v1252, %v1316
    %v1349 = vsel %vm1285, %v1253, %v1317
    %v1350 = vsel %vm1286, %v1254, %v1318
    %v1351 = vsel %vm1287, %v1255, %v1319
    %v1352 = vsel %vm1288, %v1256, %v1320
    %v1353 = vsel %vm1289, %v1257, %v1321
    %v1354 = vsel %vm1290, %v1258, %v1322
    %v1355 = vsel %vm1291, %v1259, %v1323
    %v1356 = vsel %vm1292, %v1260, %v1324
    %v1357 = vsel %vm1293, %v1261, %v1325
    %v1358 = vsel %vm1294, %v1262, %v1326
    %v1360 = vlaneseq
    %v1361 = vshrl.u32 %v1360, 7
    %v1362 = vsub.s32 0, %v1361
    %v1363 = vrot.slane %v941, %v1362
    %v1365 = vmul.f32 %v1363, %v1327
    %v1366 = vmul.f32 %v1363, %v1328
    %v1367 = vmul.f32 %v1363, %v1329
    %v1368 = vmul.f32 %v1363, %v1330
    %v1369 = vmul.f32 %v1363, %v1331
    %v1370 = vmul.f32 %v1363, %v1332
    %v1371 = vmul.f32 %v1363, %v1333
    %v1372 = vmul.f32 %v1363, %v1334
    %v1373 = vmul.f32 %v1363, %v1335
    %v1374 = vmul.f32 %v1363, %v1336
    %v1375 = vmul.f32 %v1363, %v1337
    %v1376 = vmul.f32 %v1363, %v1338
    %v1377 = vmul.f32 %v1363, %v1339
    %v1378 = vmul.f32 %v1363, %v1340
    %v1379 = vmul.f32 %v1363, %v1341
    %v1380 = vmul.f32 %v1363, %v1342
    %v1381 = vmul.f32 %v1363, %v1343
    %v1382 = vmul.f32 %v1363, %v1344
    %v1383 = vmul.f32 %v1363, %v1345
    %v1384 = vmul.f32 %v1363, %v1346
    %v1385 = vmul.f32 %v1363, %v1347
    %v1386 = vmul.f32 %v1363, %v1348
    %v1387 = vmul.f32 %v1363, %v1349
    %v1388 = vmul.f32 %v1363, %v1350
    %v1389 = vmul.f32 %v1363, %v1351
    %v1390 = vmul.f32 %v1363, %v1352
    %v1391 = vmul.f32 %v1363, %v1353
    %v1392 = vmul.f32 %v1363, %v1354
    %v1393 = vmul.f32 %v1363, %v1355
    %v1394 = vmul.f32 %v1363, %v1356
    %v1395 = vmul.f32 %v1363, %v1357
    %v1396 = vmul.f32 %v1363, %v1358
    %1397 = vadd.xlane.f32.xlu0 %v1365
    %v1398 = vpop.xlane.xlu0 %1397
    %1399 = vadd.xlane.f32.xlu0 %v1366
    %v1400 = vpop.xlane.xlu0 %1399
    %1401 = vadd.xlane.f32.xlu0 %v1367
    %v1402 = vpop.xlane.xlu0 %1401
    %1403 = vadd.xlane.f32.xlu0 %v1368
    %v1404 = vpop.xlane.xlu0 %1403
    %1405 = vadd.xlane.f32.xlu0 %v1369
    %v1406 = vpop.xlane.xlu0 %1405
    %1407 = vadd.xlane.f32.xlu0 %v1370
    %v1408 = vpop.xlane.xlu0 %1407
    %1409 = vadd.xlane.f32.xlu0 %v1371
    %v1410 = vpop.xlane.xlu0 %1409
    %1411 = vadd.xlane.f32.xlu0 %v1372
    %v1412 = vpop.xlane.xlu0 %1411
    %1413 = vadd.xlane.f32.xlu0 %v1373
    %v1414 = vpop.xlane.xlu0 %1413
    %1415 = vadd.xlane.f32.xlu0 %v1374
    %v1416 = vpop.xlane.xlu0 %1415
    %1417 = vadd.xlane.f32.xlu0 %v1375
    %v1418 = vpop.xlane.xlu0 %1417
    %1419 = vadd.xlane.f32.xlu0 %v1376
    %v1420 = vpop.xlane.xlu0 %1419
    %1421 = vadd.xlane.f32.xlu0 %v1377
    %v1422 = vpop.xlane.xlu0 %1421
    %1423 = vadd.xlane.f32.xlu0 %v1378
    %v1424 = vpop.xlane.xlu0 %1423
    %1425 = vadd.xlane.f32.xlu0 %v1379
    %v1426 = vpop.xlane.xlu0 %1425
    %1427 = vadd.xlane.f32.xlu0 %v1380
    %v1428 = vpop.xlane.xlu0 %1427
    %1429 = vadd.xlane.f32.xlu0 %v1381
    %v1430 = vpop.xlane.xlu0 %1429
    %1431 = vadd.xlane.f32.xlu0 %v1382
    %v1432 = vpop.xlane.xlu0 %1431
    %1433 = vadd.xlane.f32.xlu0 %v1383
    %v1434 = vpop.xlane.xlu0 %1433
    %1435 = vadd.xlane.f32.xlu0 %v1384
    %v1436 = vpop.xlane.xlu0 %1435
    %1437 = vadd.xlane.f32.xlu0 %v1385
    %v1438 = vpop.xlane.xlu0 %1437
    %1439 = vadd.xlane.f32.xlu0 %v1386
    %v1440 = vpop.xlane.xlu0 %1439
    %1441 = vadd.xlane.f32.xlu0 %v1387
    %v1442 = vpop.xlane.xlu0 %1441
    %1443 = vadd.xlane.f32.xlu0 %v1388
    %v1444 = vpop.xlane.xlu0 %1443
    %1445 = vadd.xlane.f32.xlu0 %v1389
    %v1446 = vpop.xlane.xlu0 %1445
    %1447 = vadd.xlane.f32.xlu0 %v1390
    %v1448 = vpop.xlane.xlu0 %1447
    %1449 = vadd.xlane.f32.xlu0 %v1391
    %v1450 = vpop.xlane.xlu0 %1449
    %1451 = vadd.xlane.f32.xlu0 %v1392
    %v1452 = vpop.xlane.xlu0 %1451
    %1453 = vadd.xlane.f32.xlu0 %v1393
    %v1454 = vpop.xlane.xlu0 %1453
    %1455 = vadd.xlane.f32.xlu0 %v1394
    %v1456 = vpop.xlane.xlu0 %1455
    %1457 = vadd.xlane.f32.xlu0 %v1395
    %v1458 = vpop.xlane.xlu0 %1457
    %1459 = vadd.xlane.f32.xlu0 %v1396
    %v1460 = vpop.xlane.xlu0 %1459
    %v1493 = vlaneseq
    %v1494 = vshrl.u32 %v1493, 7
    %v1495 = vsub.s32 %v644, %v1494
    %v1496 = vrot.slane %v1398, %v1495
    %v1497 = vlaneseq
    %v1498 = vshrl.u32 %v1497, 7
    %v1499 = vsub.s32 %v649, %v1498
    %v1500 = vrot.slane %v1400, %v1499
    %v1501 = vsel %vm654, %v1500, %v1496
    %v1502 = vlaneseq
    %v1503 = vshrl.u32 %v1502, 7
    %v1504 = vsub.s32 %v644, %v1503
    %v1505 = vrot.slane %v1402, %v1504
    %v1506 = vlaneseq
    %v1507 = vshrl.u32 %v1506, 7
    %v1508 = vsub.s32 %v649, %v1507
    %v1509 = vrot.slane %v1404, %v1508
    %v1510 = vsel %vm654, %v1509, %v1505
    %v1511 = vlaneseq
    %v1512 = vshrl.u32 %v1511, 7
    %v1513 = vsub.s32 %v644, %v1512
    %v1514 = vrot.slane %v1406, %v1513
    %v1515 = vlaneseq
    %v1516 = vshrl.u32 %v1515, 7
    %v1517 = vsub.s32 %v649, %v1516
    %v1518 = vrot.slane %v1408, %v1517
    %v1519 = vsel %vm654, %v1518, %v1514
    %v1520 = vlaneseq
    %v1521 = vshrl.u32 %v1520, 7
    %v1522 = vsub.s32 %v644, %v1521
    %v1523 = vrot.slane %v1410, %v1522
    %v1524 = vlaneseq
    %v1525 = vshrl.u32 %v1524, 7
    %v1526 = vsub.s32 %v649, %v1525
    %v1527 = vrot.slane %v1412, %v1526
    %v1528 = vsel %vm654, %v1527, %v1523
    %v1529 = vlaneseq
    %v1530 = vshrl.u32 %v1529, 7
    %v1531 = vsub.s32 %v644, %v1530
    %v1532 = vrot.slane %v1414, %v1531
    %v1533 = vlaneseq
    %v1534 = vshrl.u32 %v1533, 7
    %v1535 = vsub.s32 %v649, %v1534
    %v1536 = vrot.slane %v1416, %v1535
    %v1537 = vsel %vm654, %v1536, %v1532
    %v1538 = vlaneseq
    %v1539 = vshrl.u32 %v1538, 7
    %v1540 = vsub.s32 %v644, %v1539
    %v1541 = vrot.slane %v1418, %v1540
    %v1542 = vlaneseq
    %v1543 = vshrl.u32 %v1542, 7
    %v1544 = vsub.s32 %v649, %v1543
    %v1545 = vrot.slane %v1420, %v1544
    %v1546 = vsel %vm654, %v1545, %v1541
    %v1547 = vlaneseq
    %v1548 = vshrl.u32 %v1547, 7
    %v1549 = vsub.s32 %v644, %v1548
    %v1550 = vrot.slane %v1422, %v1549
    %v1551 = vlaneseq
    %v1552 = vshrl.u32 %v1551, 7
    %v1553 = vsub.s32 %v649, %v1552
    %v1554 = vrot.slane %v1424, %v1553
    %v1555 = vsel %vm654, %v1554, %v1550
    %v1556 = vlaneseq
    %v1557 = vshrl.u32 %v1556, 7
    %v1558 = vsub.s32 %v644, %v1557
    %v1559 = vrot.slane %v1426, %v1558
    %v1560 = vlaneseq
    %v1561 = vshrl.u32 %v1560, 7
    %v1562 = vsub.s32 %v649, %v1561
    %v1563 = vrot.slane %v1428, %v1562
    %v1564 = vsel %vm654, %v1563, %v1559
    %v1565 = vlaneseq
    %v1566 = vshrl.u32 %v1565, 7
    %v1567 = vsub.s32 %v644, %v1566
    %v1568 = vrot.slane %v1430, %v1567
    %v1569 = vlaneseq
    %v1570 = vshrl.u32 %v1569, 7
    %v1571 = vsub.s32 %v649, %v1570
    %v1572 = vrot.slane %v1432, %v1571
    %v1573 = vsel %vm654, %v1572, %v1568
    %v1574 = vlaneseq
    %v1575 = vshrl.u32 %v1574, 7
    %v1576 = vsub.s32 %v644, %v1575
    %v1577 = vrot.slane %v1434, %v1576
    %v1578 = vlaneseq
    %v1579 = vshrl.u32 %v1578, 7
    %v1580 = vsub.s32 %v649, %v1579
    %v1581 = vrot.slane %v1436, %v1580
    %v1582 = vsel %vm654, %v1581, %v1577
    %v1583 = vlaneseq
    %v1584 = vshrl.u32 %v1583, 7
    %v1585 = vsub.s32 %v644, %v1584
    %v1586 = vrot.slane %v1438, %v1585
    %v1587 = vlaneseq
    %v1588 = vshrl.u32 %v1587, 7
    %v1589 = vsub.s32 %v649, %v1588
    %v1590 = vrot.slane %v1440, %v1589
    %v1591 = vsel %vm654, %v1590, %v1586
    %v1592 = vlaneseq
    %v1593 = vshrl.u32 %v1592, 7
    %v1594 = vsub.s32 %v644, %v1593
    %v1595 = vrot.slane %v1442, %v1594
    %v1596 = vlaneseq
    %v1597 = vshrl.u32 %v1596, 7
    %v1598 = vsub.s32 %v649, %v1597
    %v1599 = vrot.slane %v1444, %v1598
    %v1600 = vsel %vm654, %v1599, %v1595
    %v1601 = vlaneseq
    %v1602 = vshrl.u32 %v1601, 7
    %v1603 = vsub.s32 %v644, %v1602
    %v1604 = vrot.slane %v1446, %v1603
    %v1605 = vlaneseq
    %v1606 = vshrl.u32 %v1605, 7
    %v1607 = vsub.s32 %v649, %v1606
    %v1608 = vrot.slane %v1448, %v1607
    %v1609 = vsel %vm654, %v1608, %v1604
    %v1610 = vlaneseq
    %v1611 = vshrl.u32 %v1610, 7
    %v1612 = vsub.s32 %v644, %v1611
    %v1613 = vrot.slane %v1450, %v1612
    %v1614 = vlaneseq
    %v1615 = vshrl.u32 %v1614, 7
    %v1616 = vsub.s32 %v649, %v1615
    %v1617 = vrot.slane %v1452, %v1616
    %v1618 = vsel %vm654, %v1617, %v1613
    %v1619 = vlaneseq
    %v1620 = vshrl.u32 %v1619, 7
    %v1621 = vsub.s32 %v644, %v1620
    %v1622 = vrot.slane %v1454, %v1621
    %v1623 = vlaneseq
    %v1624 = vshrl.u32 %v1623, 7
    %v1625 = vsub.s32 %v649, %v1624
    %v1626 = vrot.slane %v1456, %v1625
    %v1627 = vsel %vm654, %v1626, %v1622
    %v1628 = vlaneseq
    %v1629 = vshrl.u32 %v1628, 7
    %v1630 = vsub.s32 %v644, %v1629
    %v1631 = vrot.slane %v1458, %v1630
    %v1632 = vlaneseq
    %v1633 = vshrl.u32 %v1632, 7
    %v1634 = vsub.s32 %v649, %v1633
    %v1635 = vrot.slane %v1460, %v1634
    %v1636 = vsel %vm654, %v1635, %v1631
    %v1637 = vsel %vm791, %v1510, %v1501
    %v1638 = vsel %vm793, %v1519, %v1637
    %v1639 = vsel %vm795, %v1528, %v1638
    %v1640 = vsel %vm797, %v1537, %v1639
    %v1641 = vsel %vm799, %v1546, %v1640
    %v1642 = vsel %vm801, %v1555, %v1641
    %v1643 = vsel %vm803, %v1564, %v1642
    %v1644 = vsel %vm791, %v1582, %v1573
    %v1645 = vsel %vm793, %v1591, %v1644
    %v1646 = vsel %vm795, %v1600, %v1645
    %v1647 = vsel %vm797, %v1609, %v1646
    %v1648 = vsel %vm799, %v1618, %v1647
    %v1649 = vsel %vm801, %v1627, %v1648
    %v1650 = vsel %vm803, %v1636, %v1649
    %v1653 = vsel %vm87, %v1643, -1e+30
    %v1654 = vsel %vm88, %v1650, -1e+30
    %v1655 = vsel %vm816, %v1653, -inf
    %1656 = vmax.xlane.f32.xlu0 %v1655
    %v1657 = vpop.xlane.xlu0 %1656
    %v1658 = vsel %vm816, %v1654, -inf
    %1659 = vmax.xlane.f32.xlu0 %v1658
    %v1660 = vpop.xlane.xlu0 %1659
    %v1661 = vsub.f32 %v1653, %v1657
    %v1662 = vsub.f32 %v1654, %v1660
    %v1663 = vmul.f32 %v1661, 1.442695
    %v1664 = vpow.pop %v1663
    %v1665 = vmul.f32 %v1662, 1.442695
    %v1666 = vpow.pop %v1665
    %v1667 = vsel %vm816, %v1664, 0.0
    %1668 = vadd.xlane.f32.xlu0 %v1667
    %v1669 = vpop.xlane.xlu0 %1668
    %v1670 = vsel %vm816, %v1666, 0.0
    %1671 = vadd.xlane.f32.xlu0 %v1670
    %v1672 = vpop.xlane.xlu0 %1671
    %v1674 = vsel %vm816, %v1664, 0
    %v1677 = vsel %vm816, %v1666, 0
    %1679 = vmatprep.subr.mxu0 0.0
    %1680 = vmatpush1.msra.mxu0 %v1041
    %1681 = vmatprep.subr.mxu0 0.0
    %1682 = vmatpush1.msra.mxu0 %v1047
    %1683 = vmatprep.subr.mxu0 0.0
    %1684 = vmatpush1.msra.mxu0 0.0
    %1685 = vmatprep.subr.mxu0 0.0
    %1686 = vmatpush1.msra.mxu0 0.0
    %1687 = vmatprep.subr.mxu0 0.0
    %1688 = vmatpush1.msra.mxu0 0.0
    %1689 = vmatprep.subr.mxu0 0.0
    %1690 = vmatpush1.msra.mxu0 0.0
    %1691 = vmatprep.subr.mxu0 0.0
    %1692 = vmatpush1.msra.mxu0 0.0
    %1693 = vmatprep.subr.mxu0 0.0
    %1694 = vmatpush1.msra.mxu0 0.0
    %1695 = vmatprep.subr.mxu0 0.0
    %1696 = vmatpush1.msra.mxu0 0.0
    %1697 = vmatprep.subr.mxu0 0.0
    %1698 = vmatpush1.msra.mxu0 0.0
    %1699 = vmatprep.subr.mxu0 0.0
    %1700 = vmatpush1.msra.mxu0 0.0
    %1701 = vmatprep.subr.mxu0 0.0
    %1702 = vmatpush1.msra.mxu0 0.0
    %1703 = vmatprep.subr.mxu0 0.0
    %1704 = vmatpush1.msra.mxu0 0.0
    %1705 = vmatprep.subr.mxu0 0.0
    %1706 = vmatpush1.msra.mxu0 0.0
    %1707 = vmatprep.subr.mxu0 0.0
    %1708 = vmatpush1.msra.mxu0 0.0
    %1709 = vmatprep.subr.mxu0 0.0
    %1710 = vmatpush1.msra.mxu0 0.0
    %1711 = vmatprep.subr.mxu0 0.0
    %1712 = vmatpush1.msra.mxu0 0.0
    %1713 = vmatprep.subr.mxu0 0.0
    %1714 = vmatpush1.msra.mxu0 0.0
    %1715 = vmatprep.subr.mxu0 0.0
    %1716 = vmatpush1.msra.mxu0 0.0
    %1717 = vmatprep.subr.mxu0 0.0
    %1718 = vmatpush1.msra.mxu0 0.0
    %1719 = vmatprep.subr.mxu0 0.0
    %1720 = vmatpush1.msra.mxu0 0.0
    %1721 = vmatprep.subr.mxu0 0.0
    %1722 = vmatpush1.msra.mxu0 0.0
    %1723 = vmatprep.subr.mxu0 0.0
    %1724 = vmatpush1.msra.mxu0 0.0
    %1725 = vmatprep.subr.mxu0 0.0
    %1726 = vmatpush1.msra.mxu0 0.0
    %1727 = vmatprep.subr.mxu0 0.0
    %1728 = vmatpush1.msra.mxu0 0.0
    %1729 = vmatprep.subr.mxu0 0.0
    %1730 = vmatpush1.msra.mxu0 0.0
    %1731 = vmatprep.subr.mxu0 0.0
    %1732 = vmatpush1.msra.mxu0 0.0
    %1733 = vmatprep.subr.mxu0 0.0
    %1734 = vmatpush1.msra.mxu0 0.0
    %1735 = vmatprep.subr.mxu0 0.0
    %1736 = vmatpush1.msra.mxu0 0.0
    %1737 = vmatprep.subr.mxu0 0.0
    %1738 = vmatpush1.msra.mxu0 0.0
    %1739 = vmatprep.subr.mxu0 0.0
    %1740 = vmatpush1.msra.mxu0 0.0
    %1741 = vmatprep.subr.mxu0 0.0
    %1742 = vmatpush1.msra.mxu0 0.0
    %1743 = vmatprep.mubr.f32.mxu0 0.0
    %1744 = vmatmul.mubr.f32.gmra.mrb[0].mxu0 %v1674
    %v1745 = vpop.f32.mrb[0].mxu0
    %v1746 = vadd.f32 0.0, %v1745
    %v1747 = vpop.f32.mrb[0].mxu0
    %1748 = vmatprep.mubr.f32.mxu0 0.0
    %1749 = vmatmul.mubr.f32.gmra.mrb[0].mxu0 %v1677
    %v1750 = vpop.f32.mrb[0].mxu0
    %v1751 = vadd.f32 0.0, %v1750
    %v1752 = vpop.f32.mrb[0].mxu0
    %1753 = vdwg.mxu0
    %v1754 = vmax.f32 %v1669, 1e-30
    %v1755 = vmax.f32 %v1672, 1e-30
    %v1756 = vrcp.pop %v1754
    %v1757 = vrcp.pop %v1755
    %v1758 = vmul.f32 %v1746, %v1756
    %v1759 = vmul.f32 %v1751, %v1757
    %v1760 = vld [vmem:[%s7] sm:$0x1]
    %v1762 = vlaneseq
    %v1763 = vshrl.u32 %v1762, 7
    %v1764 = vsub.s32 0, %v1763
    %v1765 = vrot.slane %v1760, %v1764
    %v1767 = vadd.f32 %v1758, %v1765
    %v1768 = vadd.f32 %v1759, %v1765
    %1769 = vst [vmem:[#allocation10] sm:$0xff] %v1767
    %1770 = vst [vmem:[#allocation10 + $0x8] sm:$0xff] %v1768
    // Predicated region
    $region50: #{tpu_custom_call.1} parent=1 // pred_check
      _
    $region51: #{tpu_custom_call.1} parent=1 // pred_check_branch
      %1772 = sbr.rel (0) target = $region53
    $region52: #{tpu_custom_call.1} parent=1 // pred_region
      %s1774 = ssub.s32 256, 256
      %1775 = vsyncadd [#allocation4], %s1774
      %s1776 = sshll.u32 [#allocation10], 4
      %s1777 = int_to_ptr.vmem [resolvable:$true] %s1776
      %1782 = dma.vmem_to_hbm [thread:$0]  %s1777, 256, %s8, [#allocation4], 128, 128, 8
    $region53: #{tpu_custom_call.1} parent=1 // pred_fallthru
      _
    // Predicated region
    $region54: #{tpu_custom_call.1} parent=1 // pred_check
      _
    $region55: #{tpu_custom_call.1} parent=1 // pred_check_branch
      %1784 = sbr.rel (0) target = $region57
    $region56: #{tpu_custom_call.1} parent=1 // pred_region
      %1785 = dma.done [#allocation4], 256
    $region57: #{tpu_custom_call.1} parent=1 // pred_fallthru
      _
    %1786 = vsyncpa [#allocation3], 1
    %1787 = vsyncpa [#allocation6], 1
    %1788 = vsyncpa [#allocation9], 1
    %1789 = vsyncpa [#allocation4], 1

</llo_original>
